<compile_context>
chip_gen: v6e
topology: v6e:2x2x1
jax: 0.10.0
libtpu: 0.0.40
codegen_flags: <defaults>
</compile_context>

<pallas_src>
import jax
import jax.numpy as jnp
from jax import lax
from jax.experimental import pallas as pl
from jax.experimental.pallas import tpu as pltpu

# ---- synthetic "config" --------------------------------------------------
VOCAB = 50
EMB = 16
HID = 32
B = 4
BP = 8          # batch padded to a full sublane group
T = 8
GTR_MODE = "avg"  # node feature = mean embedding of first 2 tokens


def _tree_sum(terms):
    """Pairwise (log-depth) sum of a non-empty list of arrays."""
    while len(terms) > 1:
        nxt = [a + b for a, b in zip(terms[0::2], terms[1::2])]
        if len(terms) % 2:
            nxt.append(terms[-1])
        terms = nxt
    return terms[0]


# ---- Pallas kernel -------------------------------------------------------
def gtr_encoder_kernel(x_ref, oh_ref, m_ref, wih_ref, whh_ref, b_ref, wh_ref,
                       out_ref, feat_ref, hmax_ref, cmax_ref):
    # x_ref   : [T*BP, 2E] f32   (time-major rows: row = t*BP + b)
    # oh_ref  : [T*T, BP, H] f32 (oh[t*T+k] = 1 where father(t,b) == k)
    # m_ref   : [T, BP, H]  f32  (sequence mask, broadcast over H lanes)
    # wih_ref : [2E, 4H]  whh_ref : [H, 4H]  b_ref : [1, 4H]  wh_ref : [H, H]
    # out_ref / feat_ref : [T*BP, H];  hmax_ref / cmax_ref : [BP, H]
    T_, BP_, H = m_ref.shape

    # Hoisted input projection (no serial dependence): one big MXU matmul.
    gates_x = jnp.dot(x_ref[...], wih_ref[...],
                      preferred_element_type=jnp.float32) + b_ref[...]   # [T*BP, 4H]
    whh = whh_ref[...]                                                   # [H, 4H]

    # Hoisted column scale: pre-scale the g-gate quarter by 2 so a single
    # sigmoid pass yields sigmoid(i,f,o) and sigmoid(2g) -> tanh(g)=2*sig-1.
    col = lax.broadcasted_iota(jnp.int32, (1, 4 * H), 1)
    g_scale = jnp.where((col >= 2 * H) & (col < 3 * H), 2.0, 1.0)        # [1, 4H]

    h_states = []       # unmasked h of step k (tree-memory slot k + 1)
    c_states = []
    hm_parts = []       # masked h per step (kept in registers for the store)
    hmax_acc = jnp.full((BP_, H), -jnp.inf, jnp.float32)
    cmax_acc = jnp.full((BP_, H), -jnp.inf, jnp.float32)

    for t in range(T_):
        # ---- parent gather: one-hot multiply + log-depth tree add --------
        if t == 0:
            h_prev = jnp.zeros((BP_, H), jnp.float32)
            c_prev = jnp.zeros((BP_, H), jnp.float32)
        else:
            h_prev = _tree_sum([oh_ref[t * T_ + k] * h_states[k]
                                for k in range(t)])
            c_prev = _tree_sum([oh_ref[t * T_ + k] * c_states[k]
                                for k in range(t)])

        # ---- recurrent gates: only dependent matmul on the serial chain --
        gates = gates_x[t * BP_:(t + 1) * BP_, :] + jnp.dot(
            h_prev, whh, preferred_element_type=jnp.float32)             # [BP, 4H]

        # Single EUP pass over the full 4H width.
        sig = jax.nn.sigmoid(gates * g_scale)
        i_g = sig[:, 0:H]
        f_g = sig[:, H:2 * H]
        g_g = 2.0 * sig[:, 2 * H:3 * H] - 1.0       # == tanh(g)
        o_g = sig[:, 3 * H:4 * H]

        c_t = f_g * c_prev + i_g * g_g
        h_t = o_g * jnp.tanh(c_t)
        h_states.append(h_t)
        c_states.append(c_t)

        # Masked epilogue: running max accumulators, output kept in registers.
        m_t = m_ref[t]                                                   # [BP, H]
        hm = h_t * m_t
        hm_parts.append(hm)
        hmax_acc = jnp.maximum(hmax_acc, hm)
        cmax_acc = jnp.maximum(cmax_acc, c_t * m_t)

    # Single coalesced output store; W_h projection fed from registers
    # (one batched matmul, no store->reload of out_ref).
    out_val = jnp.concatenate(hm_parts, axis=0)                          # [T*BP, H]
    out_ref[...] = out_val
    feat_ref[...] = jnp.dot(out_val, wh_ref[...],
                            preferred_element_type=jnp.float32)
    hmax_ref[...] = hmax_acc
    cmax_ref[...] = cmax_acc


def gtr_encoder_pallas(x_flat, onehot_bh, mask_bh, wih_t, whh_t, bias, wh_t):
    TB = x_flat.shape[0]
    _, BP_, H = mask_bh.shape
    vmem = lambda: pl.BlockSpec(memory_space=pltpu.MemorySpace.VMEM)
    out_shapes = (
        jax.ShapeDtypeStruct((TB, H), jnp.float32),   # masked encoder outputs
        jax.ShapeDtypeStruct((TB, H), jnp.float32),   # W_h(outputs)
        jax.ShapeDtypeStruct((BP_, H), jnp.float32),  # h_max
        jax.ShapeDtypeStruct((BP_, H), jnp.float32),  # c_max
    )
    return pl.pallas_call(
        gtr_encoder_kernel,
        out_shape=out_shapes,
        in_specs=[vmem()] * 7,
        out_specs=(vmem(), vmem(), vmem(), vmem()),
    )(x_flat, onehot_bh, mask_bh, wih_t, whh_t, bias, wh_t)


# ---- pure-JAX reference (mirrors the PyTorch forward) ---------------------
def gtr_encoder_reference(x_tbf, fa_p1_tb, mask_bt, wih_t, whh_t, bias, wh_t):
    T_, B_, _ = x_tbf.shape
    H = whh_t.shape[0]
    h_mem = [jnp.zeros((B_, H), jnp.float32)]
    c_mem = [jnp.zeros((B_, H), jnp.float32)]
    outs = []
    for t in range(T_):
        fa = fa_p1_tb[t]
        h_stack = jnp.stack(h_mem)
        c_stack = jnp.stack(c_mem)
        h_prev = h_stack[fa, jnp.arange(B_)]
        c_prev = c_stack[fa, jnp.arange(B_)]
        gates = x_tbf[t] @ wih_t + h_prev @ whh_t + bias
        i_g = jax.nn.sigmoid(gates[:, :H])
        f_g = jax.nn.sigmoid(gates[:, H:2 * H])
        g_g = jnp.tanh(gates[:, 2 * H:3 * H])
        o_g = jax.nn.sigmoid(gates[:, 3 * H:])
        c_t = f_g * c_prev + i_g * g_g
        h_t = o_g * jnp.tanh(c_t)
        h_mem.append(h_t)
        c_mem.append(c_t)
        outs.append(h_t)
    out = jnp.stack(outs, axis=1) * mask_bt[:, :, None]              # [B,T,H]
    h_all = jnp.stack(h_mem[1:], axis=1) * mask_bt[:, :, None]
    c_all = jnp.stack(c_mem[1:], axis=1) * mask_bt[:, :, None]
    h_max = jnp.max(h_all, axis=1)[None]
    c_max = jnp.max(c_all, axis=1)[None]
    feat = out.reshape(-1, H) @ wh_t
    return out, feat, h_max, c_max


# ---- main -----------------------------------------------------------------
if __name__ == "__main__":
    key = jax.random.PRNGKey(0)
    ks = jax.random.split(key, 8)

    # Deterministic parameters (shapes follow GTREncoder.__init__, gtr_mode='avg')
    emb_table = 0.1 * jax.random.normal(ks[0], (VOCAB, EMB), jnp.float32)
    w_ih = jax.random.uniform(ks[1], (4 * HID, 2 * EMB), jnp.float32, -0.05, 0.05)
    w_hh = jax.random.uniform(ks[2], (4 * HID, HID), jnp.float32, -0.05, 0.05)
    b_ih = jnp.zeros((4 * HID,), jnp.float32).at[HID:2 * HID].set(1.0)
    b_hh = jnp.zeros((4 * HID,), jnp.float32).at[HID:2 * HID].set(1.0)
    w_h = jax.random.uniform(ks[3], (HID, HID), jnp.float32, -0.1, 0.1)

    # Deterministic inputs
    node_ids = jax.random.randint(ks[4], (B, T, 2), 0, VOCAB)         # src_gtr_seq_node
    rel_ids = jax.random.randint(ks[5], (B, T, 2), 0, VOCAB)          # src_gtr_seq_rel
    lengths = jnp.array([T, T - 2, T - 1, 3], jnp.int32)
    mask = (jnp.arange(T)[None, :] < lengths[:, None]).astype(jnp.float32)   # [B,T]
    raw = jax.random.randint(ks[6], (B, T), 0, 10_000)
    father = raw % (jnp.arange(T)[None, :] + 1) - 1                   # in [-1, t-1]

    # Glue: embedding + mean ('avg' mode), concat node & rel features
    node_emb = jnp.mean(emb_table[node_ids], axis=2)                  # [B,T,E]
    rel_emb = jnp.mean(emb_table[rel_ids], axis=2)                    # [B,T,E]
    x = jnp.concatenate([node_emb, rel_emb], axis=-1)                 # [B,T,2E]

    x_tbf = jnp.transpose(x, (1, 0, 2)).astype(jnp.float32)           # [T,B,2E]
    fa_p1_tb = jnp.transpose(father + 1, (1, 0)).astype(jnp.int32)    # [T,B]

    # ---- batch padding to BP=8 sublanes + lane-aligned mask layouts -------
    x_pad = jnp.zeros((T, BP, 2 * EMB), jnp.float32).at[:, :B, :].set(x_tbf)
    x_flat = x_pad.reshape(T * BP, 2 * EMB)                           # [T*BP, 2E]

    fa_pad = jnp.zeros((T, BP), jnp.int32).at[:, :B].set(fa_p1_tb)    # 0 -> zero parent
    k_idx = jnp.arange(T)[None, :, None] + 1                          # [1,T,1]
    onehot = (fa_pad[:, None, :] == k_idx).astype(jnp.float32)        # [T,T,BP]
    onehot_bh = jnp.broadcast_to(onehot[..., None],
                                 (T, T, BP, HID)).reshape(T * T, BP, HID)

    mask_pad = jnp.zeros((T, BP), jnp.float32).at[:, :B].set(jnp.transpose(mask))
    mask_bh = jnp.broadcast_to(mask_pad[..., None], (T, BP, HID))     # [T,BP,H]

    wih_t = w_ih.T                                                    # [2E,4H]
    whh_t = w_hh.T                                                    # [H,4H]
    bias = (b_ih + b_hh)[None, :]                                     # [1,4H]
    wh_t = w_h.T                                                      # [H,H]

    out_flat, feat_flat, hmax, cmax = jax.block_until_ready(
        gtr_encoder_pallas(x_flat, onehot_bh, mask_bh, wih_t, whh_t, bias, wh_t))

    # Back to PyTorch conventions (drop batch padding)
    encoder_outputs = out_flat.reshape(T, BP, HID)[:, :B].transpose(1, 0, 2)   # [B,T,H]
    encoder_feature = feat_flat.reshape(T, BP, HID)[:, :B].transpose(1, 0, 2).reshape(-1, HID)
    h_max = hmax[:B][None]                                            # [1,B,H]
    c_max = cmax[:B][None]

    # Correctness check against pure-JAX reference of the PyTorch forward
    ref_out, ref_feat, ref_hmax, ref_cmax = gtr_encoder_reference(
        x_tbf, fa_p1_tb, mask, wih_t, whh_t, bias, wh_t)
    assert jnp.allclose(encoder_outputs, ref_out, atol=2e-3, rtol=2e-3)
    assert jnp.allclose(encoder_feature, ref_feat, atol=2e-3, rtol=2e-3)
    assert jnp.allclose(h_max, ref_hmax, atol=2e-3, rtol=2e-3)
    assert jnp.allclose(c_max, ref_cmax, atol=2e-3, rtol=2e-3)

    print("KERNEL_OK")
</pallas_src>

<mosaic_0001>
module attributes {stable_mosaic.version = 11 : i64} {
  func.func @gtr_encoder_kernel(%arg0: memref<64x32xf32, #tpu.memory_space<vmem>>, %arg1: memref<64x8x32xf32, #tpu.memory_space<vmem>>, %arg2: memref<8x8x32xf32, #tpu.memory_space<vmem>>, %arg3: memref<32x128xf32, #tpu.memory_space<vmem>>, %arg4: memref<32x128xf32, #tpu.memory_space<vmem>>, %arg5: memref<1x128xf32, #tpu.memory_space<vmem>>, %arg6: memref<32x32xf32, #tpu.memory_space<vmem>>, %arg7: memref<64x32xf32, #tpu.memory_space<vmem>>, %arg8: memref<64x32xf32, #tpu.memory_space<vmem>>, %arg9: memref<8x32xf32, #tpu.memory_space<vmem>>, %arg10: memref<8x32xf32, #tpu.memory_space<vmem>>) attributes {dimension_semantics = [], scalar_prefetch = 0 : i64, scratch_operands = 0 : i64, tpu.core_type = #tpu.core_type<tc>} {
    %c0 = arith.constant 0 : index
    %c0_0 = arith.constant 0 : index
    %0 = vector.load %arg0[%c0, %c0_0] : memref<64x32xf32, #tpu.memory_space<vmem>>, vector<64x32xf32>
    %c0_1 = arith.constant 0 : index
    %c0_2 = arith.constant 0 : index
    %1 = vector.load %arg3[%c0_1, %c0_2] : memref<32x128xf32, #tpu.memory_space<vmem>>, vector<32x128xf32>
    %cst = arith.constant dense<0.000000e+00> : vector<64x128xf32>
    %2 = tpu.matmul %0, %1, %cst {dimension_numbers = #tpu.dot_dimension_numbers<[1], [0], [0], [1], [0, 0, 1, 1], [], []>} : vector<64x32xf32>, vector<32x128xf32>, vector<64x128xf32> -> vector<64x128xf32>
    %c0_3 = arith.constant 0 : index
    %c0_4 = arith.constant 0 : index
    %3 = vector.load %arg5[%c0_3, %c0_4] : memref<1x128xf32, #tpu.memory_space<vmem>>, vector<1x128xf32>
    %4 = vector.broadcast %3 : vector<1x128xf32> to vector<64x128xf32>
    %5 = arith.addf %2, %4 : vector<64x128xf32>
    %c0_5 = arith.constant 0 : index
    %c0_6 = arith.constant 0 : index
    %6 = vector.load %arg4[%c0_5, %c0_6] : memref<32x128xf32, #tpu.memory_space<vmem>>, vector<32x128xf32>
    %7 = tpu.iota {dimensions = array<i32: 1>} : vector<1x128xi32>
    %c64_i32 = arith.constant 64 : i32
    %8 = vector.broadcast %c64_i32 : i32 to vector<1x128xi32>
    %9 = arith.cmpi sge, %7, %8 : vector<1x128xi32>
    %c96_i32 = arith.constant 96 : i32
    %10 = vector.broadcast %c96_i32 : i32 to vector<1x128xi32>
    %11 = arith.cmpi slt, %7, %10 : vector<1x128xi32>
    %12 = arith.andi %9, %11 : vector<1x128xi1>
    %cst_7 = arith.constant 2.000000e+00 : f32
    %cst_8 = arith.constant 1.000000e+00 : f32
    %13 = vector.broadcast %cst_7 : f32 to vector<1x128xf32>
    %14 = vector.broadcast %cst_8 : f32 to vector<1x128xf32>
    %15 = arith.select %12, %13, %14 : vector<1x128xi1>, vector<1x128xf32>
    %cst_9 = arith.constant 0xFF800000 : f32
    %16 = vector.broadcast %cst_9 : f32 to vector<8x32xf32>
    %cst_10 = arith.constant 0xFF800000 : f32
    %17 = vector.broadcast %cst_10 : f32 to vector<8x32xf32>
    %cst_11 = arith.constant 0.000000e+00 : f32
    %18 = vector.broadcast %cst_11 : f32 to vector<8x32xf32>
    %cst_12 = arith.constant 0.000000e+00 : f32
    %19 = vector.broadcast %cst_12 : f32 to vector<8x32xf32>
    %20 = vector.extract_strided_slice %5 {offsets = [0, 0], sizes = [8, 128], strides = [1, 1]} : vector<64x128xf32> to vector<8x128xf32>
    %cst_13 = arith.constant dense<0.000000e+00> : vector<8x128xf32>
    %21 = tpu.matmul %18, %6, %cst_13 {dimension_numbers = #tpu.dot_dimension_numbers<[1], [0], [0], [1], [0, 0, 1, 1], [], []>} : vector<8x32xf32>, vector<32x128xf32>, vector<8x128xf32> -> vector<8x128xf32>
    %22 = arith.addf %20, %21 : vector<8x128xf32>
    %23 = vector.broadcast %15 : vector<1x128xf32> to vector<8x128xf32>
    %24 = arith.mulf %22, %23 : vector<8x128xf32>
    %25 = arith.negf %24 : vector<8x128xf32>
    %26 = math.exp %25 : vector<8x128xf32>
    %cst_14 = arith.constant 1.000000e+00 : f32
    %27 = vector.broadcast %cst_14 : f32 to vector<8x128xf32>
    %28 = arith.addf %27, %26 : vector<8x128xf32>
    %29 = arith.divf %27, %28 : vector<8x128xf32>
    %30 = vector.extract_strided_slice %29 {offsets = [0, 0], sizes = [8, 32], strides = [1, 1]} : vector<8x128xf32> to vector<8x32xf32>
    %31 = vector.extract_strided_slice %29 {offsets = [0, 32], sizes = [8, 32], strides = [1, 1]} : vector<8x128xf32> to vector<8x32xf32>
    %32 = vector.extract_strided_slice %29 {offsets = [0, 64], sizes = [8, 32], strides = [1, 1]} : vector<8x128xf32> to vector<8x32xf32>
    %cst_15 = arith.constant 2.000000e+00 : f32
    %33 = vector.broadcast %cst_15 : f32 to vector<8x32xf32>
    %34 = arith.mulf %33, %32 : vector<8x32xf32>
    %cst_16 = arith.constant 1.000000e+00 : f32
    %35 = vector.broadcast %cst_16 : f32 to vector<8x32xf32>
    %36 = arith.subf %34, %35 : vector<8x32xf32>
    %37 = vector.extract_strided_slice %29 {offsets = [0, 96], sizes = [8, 32], strides = [1, 1]} : vector<8x128xf32> to vector<8x32xf32>
    %38 = arith.mulf %31, %19 : vector<8x32xf32>
    %39 = arith.mulf %30, %36 : vector<8x32xf32>
    %40 = arith.addf %38, %39 : vector<8x32xf32>
    %41 = math.tanh %40 : vector<8x32xf32>
    %42 = arith.mulf %37, %41 : vector<8x32xf32>
    %c0_17 = arith.constant 0 : index
    %c0_18 = arith.constant 0 : index
    %c0_19 = arith.constant 0 : index
    %43 = vector.load %arg2[%c0_17, %c0_18, %c0_19] : memref<8x8x32xf32, #tpu.memory_space<vmem>>, vector<1x8x32xf32>
    %44 = vector.shape_cast %43 : vector<1x8x32xf32> to vector<8x32xf32>
    %45 = arith.mulf %42, %44 : vector<8x32xf32>
    %46 = arith.maximumf %16, %45 : vector<8x32xf32>
    %47 = arith.mulf %40, %44 : vector<8x32xf32>
    %48 = arith.maximumf %17, %47 : vector<8x32xf32>
    %c8 = arith.constant 8 : index
    %c0_20 = arith.constant 0 : index
    %c0_21 = arith.constant 0 : index
    %49 = vector.load %arg1[%c8, %c0_20, %c0_21] : memref<64x8x32xf32, #tpu.memory_space<vmem>>, vector<1x8x32xf32>
    %50 = vector.shape_cast %49 : vector<1x8x32xf32> to vector<8x32xf32>
    %51 = arith.mulf %50, %42 : vector<8x32xf32>
    %c8_22 = arith.constant 8 : index
    %c0_23 = arith.constant 0 : index
    %c0_24 = arith.constant 0 : index
    %52 = vector.load %arg1[%c8_22, %c0_23, %c0_24] : memref<64x8x32xf32, #tpu.memory_space<vmem>>, vector<1x8x32xf32>
    %53 = vector.shape_cast %52 : vector<1x8x32xf32> to vector<8x32xf32>
    %54 = arith.mulf %53, %40 : vector<8x32xf32>
    %55 = vector.extract_strided_slice %5 {offsets = [8, 0], sizes = [8, 128], strides = [1, 1]} : vector<64x128xf32> to vector<8x128xf32>
    %cst_25 = arith.constant dense<0.000000e+00> : vector<8x128xf32>
    %56 = tpu.matmul %51, %6, %cst_25 {dimension_numbers = #tpu.dot_dimension_numbers<[1], [0], [0], [1], [0, 0, 1, 1], [], []>} : vector<8x32xf32>, vector<32x128xf32>, vector<8x128xf32> -> vector<8x128xf32>
    %57 = arith.addf %55, %56 : vector<8x128xf32>
    %58 = vector.broadcast %15 : vector<1x128xf32> to vector<8x128xf32>
    %59 = arith.mulf %57, %58 : vector<8x128xf32>
    %60 = arith.negf %59 : vector<8x128xf32>
    %61 = math.exp %60 : vector<8x128xf32>
    %cst_26 = arith.constant 1.000000e+00 : f32
    %62 = vector.broadcast %cst_26 : f32 to vector<8x128xf32>
    %63 = arith.addf %62, %61 : vector<8x128xf32>
    %64 = arith.divf %62, %63 : vector<8x128xf32>
    %65 = vector.extract_strided_slice %64 {offsets = [0, 0], sizes = [8, 32], strides = [1, 1]} : vector<8x128xf32> to vector<8x32xf32>
    %66 = vector.extract_strided_slice %64 {offsets = [0, 32], sizes = [8, 32], strides = [1, 1]} : vector<8x128xf32> to vector<8x32xf32>
    %67 = vector.extract_strided_slice %64 {offsets = [0, 64], sizes = [8, 32], strides = [1, 1]} : vector<8x128xf32> to vector<8x32xf32>
    %cst_27 = arith.constant 2.000000e+00 : f32
    %68 = vector.broadcast %cst_27 : f32 to vector<8x32xf32>
    %69 = arith.mulf %68, %67 : vector<8x32xf32>
    %cst_28 = arith.constant 1.000000e+00 : f32
    %70 = vector.broadcast %cst_28 : f32 to vector<8x32xf32>
    %71 = arith.subf %69, %70 : vector<8x32xf32>
    %72 = vector.extract_strided_slice %64 {offsets = [0, 96], sizes = [8, 32], strides = [1, 1]} : vector<8x128xf32> to vector<8x32xf32>
    %73 = arith.mulf %66, %54 : vector<8x32xf32>
    %74 = arith.mulf %65, %71 : vector<8x32xf32>
    %75 = arith.addf %73, %74 : vector<8x32xf32>
    %76 = math.tanh %75 : vector<8x32xf32>
    %77 = arith.mulf %72, %76 : vector<8x32xf32>
    %c1 = arith.constant 1 : index
    %c0_29 = arith.constant 0 : index
    %c0_30 = arith.constant 0 : index
    %78 = vector.load %arg2[%c1, %c0_29, %c0_30] : memref<8x8x32xf32, #tpu.memory_space<vmem>>, vector<1x8x32xf32>
    %79 = vector.shape_cast %78 : vector<1x8x32xf32> to vector<8x32xf32>
    %80 = arith.mulf %77, %79 : vector<8x32xf32>
    %81 = arith.maximumf %46, %80 : vector<8x32xf32>
    %82 = arith.mulf %75, %79 : vector<8x32xf32>
    %83 = arith.maximumf %48, %82 : vector<8x32xf32>
    %c16 = arith.constant 16 : index
    %c0_31 = arith.constant 0 : index
    %c0_32 = arith.constant 0 : index
    %84 = vector.load %arg1[%c16, %c0_31, %c0_32] : memref<64x8x32xf32, #tpu.memory_space<vmem>>, vector<1x8x32xf32>
    %85 = vector.shape_cast %84 : vector<1x8x32xf32> to vector<8x32xf32>
    %86 = arith.mulf %85, %42 : vector<8x32xf32>
    %c17 = arith.constant 17 : index
    %c0_33 = arith.constant 0 : index
    %c0_34 = arith.constant 0 : index
    %87 = vector.load %arg1[%c17, %c0_33, %c0_34] : memref<64x8x32xf32, #tpu.memory_space<vmem>>, vector<1x8x32xf32>
    %88 = vector.shape_cast %87 : vector<1x8x32xf32> to vector<8x32xf32>
    %89 = arith.mulf %88, %77 : vector<8x32xf32>
    %90 = arith.addf %86, %89 : vector<8x32xf32>
    %c16_35 = arith.constant 16 : index
    %c0_36 = arith.constant 0 : index
    %c0_37 = arith.constant 0 : index
    %91 = vector.load %arg1[%c16_35, %c0_36, %c0_37] : memref<64x8x32xf32, #tpu.memory_space<vmem>>, vector<1x8x32xf32>
    %92 = vector.shape_cast %91 : vector<1x8x32xf32> to vector<8x32xf32>
    %93 = arith.mulf %92, %40 : vector<8x32xf32>
    %c17_38 = arith.constant 17 : index
    %c0_39 = arith.constant 0 : index
    %c0_40 = arith.constant 0 : index
    %94 = vector.load %arg1[%c17_38, %c0_39, %c0_40] : memref<64x8x32xf32, #tpu.memory_space<vmem>>, vector<1x8x32xf32>
    %95 = vector.shape_cast %94 : vector<1x8x32xf32> to vector<8x32xf32>
    %96 = arith.mulf %95, %75 : vector<8x32xf32>
    %97 = arith.addf %93, %96 : vector<8x32xf32>
    %98 = vector.extract_strided_slice %5 {offsets = [16, 0], sizes = [8, 128], strides = [1, 1]} : vector<64x128xf32> to vector<8x128xf32>
    %cst_41 = arith.constant dense<0.000000e+00> : vector<8x128xf32>
    %99 = tpu.matmul %90, %6, %cst_41 {dimension_numbers = #tpu.dot_dimension_numbers<[1], [0], [0], [1], [0, 0, 1, 1], [], []>} : vector<8x32xf32>, vector<32x128xf32>, vector<8x128xf32> -> vector<8x128xf32>
    %100 = arith.addf %98, %99 : vector<8x128xf32>
    %101 = vector.broadcast %15 : vector<1x128xf32> to vector<8x128xf32>
    %102 = arith.mulf %100, %101 : vector<8x128xf32>
    %103 = arith.negf %102 : vector<8x128xf32>
    %104 = math.exp %103 : vector<8x128xf32>
    %cst_42 = arith.constant 1.000000e+00 : f32
    %105 = vector.broadcast %cst_42 : f32 to vector<8x128xf32>
    %106 = arith.addf %105, %104 : vector<8x128xf32>
    %107 = arith.divf %105, %106 : vector<8x128xf32>
    %108 = vector.extract_strided_slice %107 {offsets = [0, 0], sizes = [8, 32], strides = [1, 1]} : vector<8x128xf32> to vector<8x32xf32>
    %109 = vector.extract_strided_slice %107 {offsets = [0, 32], sizes = [8, 32], strides = [1, 1]} : vector<8x128xf32> to vector<8x32xf32>
    %110 = vector.extract_strided_slice %107 {offsets = [0, 64], sizes = [8, 32], strides = [1, 1]} : vector<8x128xf32> to vector<8x32xf32>
    %cst_43 = arith.constant 2.000000e+00 : f32
    %111 = vector.broadcast %cst_43 : f32 to vector<8x32xf32>
    %112 = arith.mulf %111, %110 : vector<8x32xf32>
    %cst_44 = arith.constant 1.000000e+00 : f32
    %113 = vector.broadcast %cst_44 : f32 to vector<8x32xf32>
    %114 = arith.subf %112, %113 : vector<8x32xf32>
    %115 = vector.extract_strided_slice %107 {offsets = [0, 96], sizes = [8, 32], strides = [1, 1]} : vector<8x128xf32> to vector<8x32xf32>
    %116 = arith.mulf %109, %97 : vector<8x32xf32>
    %117 = arith.mulf %108, %114 : vector<8x32xf32>
    %118 = arith.addf %116, %117 : vector<8x32xf32>
    %119 = math.tanh %118 : vector<8x32xf32>
    %120 = arith.mulf %115, %119 : vector<8x32xf32>
    %c2 = arith.constant 2 : index
    %c0_45 = arith.constant 0 : index
    %c0_46 = arith.constant 0 : index
    %121 = vector.load %arg2[%c2, %c0_45, %c0_46] : memref<8x8x32xf32, #tpu.memory_space<vmem>>, vector<1x8x32xf32>
    %122 = vector.shape_cast %121 : vector<1x8x32xf32> to vector<8x32xf32>
    %123 = arith.mulf %120, %122 : vector<8x32xf32>
    %124 = arith.maximumf %81, %123 : vector<8x32xf32>
    %125 = arith.mulf %118, %122 : vector<8x32xf32>
    %126 = arith.maximumf %83, %125 : vector<8x32xf32>
    %c24 = arith.constant 24 : index
    %c0_47 = arith.constant 0 : index
    %c0_48 = arith.constant 0 : index
    %127 = vector.load %arg1[%c24, %c0_47, %c0_48] : memref<64x8x32xf32, #tpu.memory_space<vmem>>, vector<1x8x32xf32>
    %128 = vector.shape_cast %127 : vector<1x8x32xf32> to vector<8x32xf32>
    %129 = arith.mulf %128, %42 : vector<8x32xf32>
    %c25 = arith.constant 25 : index
    %c0_49 = arith.constant 0 : index
    %c0_50 = arith.constant 0 : index
    %130 = vector.load %arg1[%c25, %c0_49, %c0_50] : memref<64x8x32xf32, #tpu.memory_space<vmem>>, vector<1x8x32xf32>
    %131 = vector.shape_cast %130 : vector<1x8x32xf32> to vector<8x32xf32>
    %132 = arith.mulf %131, %77 : vector<8x32xf32>
    %c26 = arith.constant 26 : index
    %c0_51 = arith.constant 0 : index
    %c0_52 = arith.constant 0 : index
    %133 = vector.load %arg1[%c26, %c0_51, %c0_52] : memref<64x8x32xf32, #tpu.memory_space<vmem>>, vector<1x8x32xf32>
    %134 = vector.shape_cast %133 : vector<1x8x32xf32> to vector<8x32xf32>
    %135 = arith.mulf %134, %120 : vector<8x32xf32>
    %136 = arith.addf %129, %132 : vector<8x32xf32>
    %137 = arith.addf %136, %135 : vector<8x32xf32>
    %c24_53 = arith.constant 24 : index
    %c0_54 = arith.constant 0 : index
    %c0_55 = arith.constant 0 : index
    %138 = vector.load %arg1[%c24_53, %c0_54, %c0_55] : memref<64x8x32xf32, #tpu.memory_space<vmem>>, vector<1x8x32xf32>
    %139 = vector.shape_cast %138 : vector<1x8x32xf32> to vector<8x32xf32>
    %140 = arith.mulf %139, %40 : vector<8x32xf32>
    %c25_56 = arith.constant 25 : index
    %c0_57 = arith.constant 0 : index
    %c0_58 = arith.constant 0 : index
    %141 = vector.load %arg1[%c25_56, %c0_57, %c0_58] : memref<64x8x32xf32, #tpu.memory_space<vmem>>, vector<1x8x32xf32>
    %142 = vector.shape_cast %141 : vector<1x8x32xf32> to vector<8x32xf32>
    %143 = arith.mulf %142, %75 : vector<8x32xf32>
    %c26_59 = arith.constant 26 : index
    %c0_60 = arith.constant 0 : index
    %c0_61 = arith.constant 0 : index
    %144 = vector.load %arg1[%c26_59, %c0_60, %c0_61] : memref<64x8x32xf32, #tpu.memory_space<vmem>>, vector<1x8x32xf32>
    %145 = vector.shape_cast %144 : vector<1x8x32xf32> to vector<8x32xf32>
    %146 = arith.mulf %145, %118 : vector<8x32xf32>
    %147 = arith.addf %140, %143 : vector<8x32xf32>
    %148 = arith.addf %147, %146 : vector<8x32xf32>
    %149 = vector.extract_strided_slice %5 {offsets = [24, 0], sizes = [8, 128], strides = [1, 1]} : vector<64x128xf32> to vector<8x128xf32>
    %cst_62 = arith.constant dense<0.000000e+00> : vector<8x128xf32>
    %150 = tpu.matmul %137, %6, %cst_62 {dimension_numbers = #tpu.dot_dimension_numbers<[1], [0], [0], [1], [0, 0, 1, 1], [], []>} : vector<8x32xf32>, vector<32x128xf32>, vector<8x128xf32> -> vector<8x128xf32>
    %151 = arith.addf %149, %150 : vector<8x128xf32>
    %152 = vector.broadcast %15 : vector<1x128xf32> to vector<8x128xf32>
    %153 = arith.mulf %151, %152 : vector<8x128xf32>
    %154 = arith.negf %153 : vector<8x128xf32>
    %155 = math.exp %154 : vector<8x128xf32>
    %cst_63 = arith.constant 1.000000e+00 : f32
    %156 = vector.broadcast %cst_63 : f32 to vector<8x128xf32>
    %157 = arith.addf %156, %155 : vector<8x128xf32>
    %158 = arith.divf %156, %157 : vector<8x128xf32>
    %159 = vector.extract_strided_slice %158 {offsets = [0, 0], sizes = [8, 32], strides = [1, 1]} : vector<8x128xf32> to vector<8x32xf32>
    %160 = vector.extract_strided_slice %158 {offsets = [0, 32], sizes = [8, 32], strides = [1, 1]} : vector<8x128xf32> to vector<8x32xf32>
    %161 = vector.extract_strided_slice %158 {offsets = [0, 64], sizes = [8, 32], strides = [1, 1]} : vector<8x128xf32> to vector<8x32xf32>
    %cst_64 = arith.constant 2.000000e+00 : f32
    %162 = vector.broadcast %cst_64 : f32 to vector<8x32xf32>
    %163 = arith.mulf %162, %161 : vector<8x32xf32>
    %cst_65 = arith.constant 1.000000e+00 : f32
    %164 = vector.broadcast %cst_65 : f32 to vector<8x32xf32>
    %165 = arith.subf %163, %164 : vector<8x32xf32>
    %166 = vector.extract_strided_slice %158 {offsets = [0, 96], sizes = [8, 32], strides = [1, 1]} : vector<8x128xf32> to vector<8x32xf32>
    %167 = arith.mulf %160, %148 : vector<8x32xf32>
    %168 = arith.mulf %159, %165 : vector<8x32xf32>
    %169 = arith.addf %167, %168 : vector<8x32xf32>
    %170 = math.tanh %169 : vector<8x32xf32>
    %171 = arith.mulf %166, %170 : vector<8x32xf32>
    %c3 = arith.constant 3 : index
    %c0_66 = arith.constant 0 : index
    %c0_67 = arith.constant 0 : index
    %172 = vector.load %arg2[%c3, %c0_66, %c0_67] : memref<8x8x32xf32, #tpu.memory_space<vmem>>, vector<1x8x32xf32>
    %173 = vector.shape_cast %172 : vector<1x8x32xf32> to vector<8x32xf32>
    %174 = arith.mulf %171, %173 : vector<8x32xf32>
    %175 = arith.maximumf %124, %174 : vector<8x32xf32>
    %176 = arith.mulf %169, %173 : vector<8x32xf32>
    %177 = arith.maximumf %126, %176 : vector<8x32xf32>
    %c32 = arith.constant 32 : index
    %c0_68 = arith.constant 0 : index
    %c0_69 = arith.constant 0 : index
    %178 = vector.load %arg1[%c32, %c0_68, %c0_69] : memref<64x8x32xf32, #tpu.memory_space<vmem>>, vector<1x8x32xf32>
    %179 = vector.shape_cast %178 : vector<1x8x32xf32> to vector<8x32xf32>
    %180 = arith.mulf %179, %42 : vector<8x32xf32>
    %c33 = arith.constant 33 : index
    %c0_70 = arith.constant 0 : index
    %c0_71 = arith.constant 0 : index
    %181 = vector.load %arg1[%c33, %c0_70, %c0_71] : memref<64x8x32xf32, #tpu.memory_space<vmem>>, vector<1x8x32xf32>
    %182 = vector.shape_cast %181 : vector<1x8x32xf32> to vector<8x32xf32>
    %183 = arith.mulf %182, %77 : vector<8x32xf32>
    %c34 = arith.constant 34 : index
    %c0_72 = arith.constant 0 : index
    %c0_73 = arith.constant 0 : index
    %184 = vector.load %arg1[%c34, %c0_72, %c0_73] : memref<64x8x32xf32, #tpu.memory_space<vmem>>, vector<1x8x32xf32>
    %185 = vector.shape_cast %184 : vector<1x8x32xf32> to vector<8x32xf32>
    %186 = arith.mulf %185, %120 : vector<8x32xf32>
    %c35 = arith.constant 35 : index
    %c0_74 = arith.constant 0 : index
    %c0_75 = arith.constant 0 : index
    %187 = vector.load %arg1[%c35, %c0_74, %c0_75] : memref<64x8x32xf32, #tpu.memory_space<vmem>>, vector<1x8x32xf32>
    %188 = vector.shape_cast %187 : vector<1x8x32xf32> to vector<8x32xf32>
    %189 = arith.mulf %188, %171 : vector<8x32xf32>
    %190 = arith.addf %180, %183 : vector<8x32xf32>
    %191 = arith.addf %186, %189 : vector<8x32xf32>
    %192 = arith.addf %190, %191 : vector<8x32xf32>
    %c32_76 = arith.constant 32 : index
    %c0_77 = arith.constant 0 : index
    %c0_78 = arith.constant 0 : index
    %193 = vector.load %arg1[%c32_76, %c0_77, %c0_78] : memref<64x8x32xf32, #tpu.memory_space<vmem>>, vector<1x8x32xf32>
    %194 = vector.shape_cast %193 : vector<1x8x32xf32> to vector<8x32xf32>
    %195 = arith.mulf %194, %40 : vector<8x32xf32>
    %c33_79 = arith.constant 33 : index
    %c0_80 = arith.constant 0 : index
    %c0_81 = arith.constant 0 : index
    %196 = vector.load %arg1[%c33_79, %c0_80, %c0_81] : memref<64x8x32xf32, #tpu.memory_space<vmem>>, vector<1x8x32xf32>
    %197 = vector.shape_cast %196 : vector<1x8x32xf32> to vector<8x32xf32>
    %198 = arith.mulf %197, %75 : vector<8x32xf32>
    %c34_82 = arith.constant 34 : index
    %c0_83 = arith.constant 0 : index
    %c0_84 = arith.constant 0 : index
    %199 = vector.load %arg1[%c34_82, %c0_83, %c0_84] : memref<64x8x32xf32, #tpu.memory_space<vmem>>, vector<1x8x32xf32>
    %200 = vector.shape_cast %199 : vector<1x8x32xf32> to vector<8x32xf32>
    %201 = arith.mulf %200, %118 : vector<8x32xf32>
    %c35_85 = arith.constant 35 : index
    %c0_86 = arith.constant 0 : index
    %c0_87 = arith.constant 0 : index
    %202 = vector.load %arg1[%c35_85, %c0_86, %c0_87] : memref<64x8x32xf32, #tpu.memory_space<vmem>>, vector<1x8x32xf32>
    %203 = vector.shape_cast %202 : vector<1x8x32xf32> to vector<8x32xf32>
    %204 = arith.mulf %203, %169 : vector<8x32xf32>
    %205 = arith.addf %195, %198 : vector<8x32xf32>
    %206 = arith.addf %201, %204 : vector<8x32xf32>
    %207 = arith.addf %205, %206 : vector<8x32xf32>
    %208 = vector.extract_strided_slice %5 {offsets = [32, 0], sizes = [8, 128], strides = [1, 1]} : vector<64x128xf32> to vector<8x128xf32>
    %cst_88 = arith.constant dense<0.000000e+00> : vector<8x128xf32>
    %209 = tpu.matmul %192, %6, %cst_88 {dimension_numbers = #tpu.dot_dimension_numbers<[1], [0], [0], [1], [0, 0, 1, 1], [], []>} : vector<8x32xf32>, vector<32x128xf32>, vector<8x128xf32> -> vector<8x128xf32>
    %210 = arith.addf %208, %209 : vector<8x128xf32>
    %211 = vector.broadcast %15 : vector<1x128xf32> to vector<8x128xf32>
    %212 = arith.mulf %210, %211 : vector<8x128xf32>
    %213 = arith.negf %212 : vector<8x128xf32>
    %214 = math.exp %213 : vector<8x128xf32>
    %cst_89 = arith.constant 1.000000e+00 : f32
    %215 = vector.broadcast %cst_89 : f32 to vector<8x128xf32>
    %216 = arith.addf %215, %214 : vector<8x128xf32>
    %217 = arith.divf %215, %216 : vector<8x128xf32>
    %218 = vector.extract_strided_slice %217 {offsets = [0, 0], sizes = [8, 32], strides = [1, 1]} : vector<8x128xf32> to vector<8x32xf32>
    %219 = vector.extract_strided_slice %217 {offsets = [0, 32], sizes = [8, 32], strides = [1, 1]} : vector<8x128xf32> to vector<8x32xf32>
    %220 = vector.extract_strided_slice %217 {offsets = [0, 64], sizes = [8, 32], strides = [1, 1]} : vector<8x128xf32> to vector<8x32xf32>
    %cst_90 = arith.constant 2.000000e+00 : f32
    %221 = vector.broadcast %cst_90 : f32 to vector<8x32xf32>
    %222 = arith.mulf %221, %220 : vector<8x32xf32>
    %cst_91 = arith.constant 1.000000e+00 : f32
    %223 = vector.broadcast %cst_91 : f32 to vector<8x32xf32>
    %224 = arith.subf %222, %223 : vector<8x32xf32>
    %225 = vector.extract_strided_slice %217 {offsets = [0, 96], sizes = [8, 32], strides = [1, 1]} : vector<8x128xf32> to vector<8x32xf32>
    %226 = arith.mulf %219, %207 : vector<8x32xf32>
    %227 = arith.mulf %218, %224 : vector<8x32xf32>
    %228 = arith.addf %226, %227 : vector<8x32xf32>
    %229 = math.tanh %228 : vector<8x32xf32>
    %230 = arith.mulf %225, %229 : vector<8x32xf32>
    %c4 = arith.constant 4 : index
    %c0_92 = arith.constant 0 : index
    %c0_93 = arith.constant 0 : index
    %231 = vector.load %arg2[%c4, %c0_92, %c0_93] : memref<8x8x32xf32, #tpu.memory_space<vmem>>, vector<1x8x32xf32>
    %232 = vector.shape_cast %231 : vector<1x8x32xf32> to vector<8x32xf32>
    %233 = arith.mulf %230, %232 : vector<8x32xf32>
    %234 = arith.maximumf %175, %233 : vector<8x32xf32>
    %235 = arith.mulf %228, %232 : vector<8x32xf32>
    %236 = arith.maximumf %177, %235 : vector<8x32xf32>
    %c40 = arith.constant 40 : index
    %c0_94 = arith.constant 0 : index
    %c0_95 = arith.constant 0 : index
    %237 = vector.load %arg1[%c40, %c0_94, %c0_95] : memref<64x8x32xf32, #tpu.memory_space<vmem>>, vector<1x8x32xf32>
    %238 = vector.shape_cast %237 : vector<1x8x32xf32> to vector<8x32xf32>
    %239 = arith.mulf %238, %42 : vector<8x32xf32>
    %c41 = arith.constant 41 : index
    %c0_96 = arith.constant 0 : index
    %c0_97 = arith.constant 0 : index
    %240 = vector.load %arg1[%c41, %c0_96, %c0_97] : memref<64x8x32xf32, #tpu.memory_space<vmem>>, vector<1x8x32xf32>
    %241 = vector.shape_cast %240 : vector<1x8x32xf32> to vector<8x32xf32>
    %242 = arith.mulf %241, %77 : vector<8x32xf32>
    %c42 = arith.constant 42 : index
    %c0_98 = arith.constant 0 : index
    %c0_99 = arith.constant 0 : index
    %243 = vector.load %arg1[%c42, %c0_98, %c0_99] : memref<64x8x32xf32, #tpu.memory_space<vmem>>, vector<1x8x32xf32>
    %244 = vector.shape_cast %243 : vector<1x8x32xf32> to vector<8x32xf32>
    %245 = arith.mulf %244, %120 : vector<8x32xf32>
    %c43 = arith.constant 43 : index
    %c0_100 = arith.constant 0 : index
    %c0_101 = arith.constant 0 : index
    %246 = vector.load %arg1[%c43, %c0_100, %c0_101] : memref<64x8x32xf32, #tpu.memory_space<vmem>>, vector<1x8x32xf32>
    %247 = vector.shape_cast %246 : vector<1x8x32xf32> to vector<8x32xf32>
    %248 = arith.mulf %247, %171 : vector<8x32xf32>
    %c44 = arith.constant 44 : index
    %c0_102 = arith.constant 0 : index
    %c0_103 = arith.constant 0 : index
    %249 = vector.load %arg1[%c44, %c0_102, %c0_103] : memref<64x8x32xf32, #tpu.memory_space<vmem>>, vector<1x8x32xf32>
    %250 = vector.shape_cast %249 : vector<1x8x32xf32> to vector<8x32xf32>
    %251 = arith.mulf %250, %230 : vector<8x32xf32>
    %252 = arith.addf %239, %242 : vector<8x32xf32>
    %253 = arith.addf %245, %248 : vector<8x32xf32>
    %254 = arith.addf %252, %253 : vector<8x32xf32>
    %255 = arith.addf %254, %251 : vector<8x32xf32>
    %c40_104 = arith.constant 40 : index
    %c0_105 = arith.constant 0 : index
    %c0_106 = arith.constant 0 : index
    %256 = vector.load %arg1[%c40_104, %c0_105, %c0_106] : memref<64x8x32xf32, #tpu.memory_space<vmem>>, vector<1x8x32xf32>
    %257 = vector.shape_cast %256 : vector<1x8x32xf32> to vector<8x32xf32>
    %258 = arith.mulf %257, %40 : vector<8x32xf32>
    %c41_107 = arith.constant 41 : index
    %c0_108 = arith.constant 0 : index
    %c0_109 = arith.constant 0 : index
    %259 = vector.load %arg1[%c41_107, %c0_108, %c0_109] : memref<64x8x32xf32, #tpu.memory_space<vmem>>, vector<1x8x32xf32>
    %260 = vector.shape_cast %259 : vector<1x8x32xf32> to vector<8x32xf32>
    %261 = arith.mulf %260, %75 : vector<8x32xf32>
    %c42_110 = arith.constant 42 : index
    %c0_111 = arith.constant 0 : index
    %c0_112 = arith.constant 0 : index
    %262 = vector.load %arg1[%c42_110, %c0_111, %c0_112] : memref<64x8x32xf32, #tpu.memory_space<vmem>>, vector<1x8x32xf32>
    %263 = vector.shape_cast %262 : vector<1x8x32xf32> to vector<8x32xf32>
    %264 = arith.mulf %263, %118 : vector<8x32xf32>
    %c43_113 = arith.constant 43 : index
    %c0_114 = arith.constant 0 : index
    %c0_115 = arith.constant 0 : index
    %265 = vector.load %arg1[%c43_113, %c0_114, %c0_115] : memref<64x8x32xf32, #tpu.memory_space<vmem>>, vector<1x8x32xf32>
    %266 = vector.shape_cast %265 : vector<1x8x32xf32> to vector<8x32xf32>
    %267 = arith.mulf %266, %169 : vector<8x32xf32>
    %c44_116 = arith.constant 44 : index
    %c0_117 = arith.constant 0 : index
    %c0_118 = arith.constant 0 : index
    %268 = vector.load %arg1[%c44_116, %c0_117, %c0_118] : memref<64x8x32xf32, #tpu.memory_space<vmem>>, vector<1x8x32xf32>
    %269 = vector.shape_cast %268 : vector<1x8x32xf32> to vector<8x32xf32>
    %270 = arith.mulf %269, %228 : vector<8x32xf32>
    %271 = arith.addf %258, %261 : vector<8x32xf32>
    %272 = arith.addf %264, %267 : vector<8x32xf32>
    %273 = arith.addf %271, %272 : vector<8x32xf32>
    %274 = arith.addf %273, %270 : vector<8x32xf32>
    %275 = vector.extract_strided_slice %5 {offsets = [40, 0], sizes = [8, 128], strides = [1, 1]} : vector<64x128xf32> to vector<8x128xf32>
    %cst_119 = arith.constant dense<0.000000e+00> : vector<8x128xf32>
    %276 = tpu.matmul %255, %6, %cst_119 {dimension_numbers = #tpu.dot_dimension_numbers<[1], [0], [0], [1], [0, 0, 1, 1], [], []>} : vector<8x32xf32>, vector<32x128xf32>, vector<8x128xf32> -> vector<8x128xf32>
    %277 = arith.addf %275, %276 : vector<8x128xf32>
    %278 = vector.broadcast %15 : vector<1x128xf32> to vector<8x128xf32>
    %279 = arith.mulf %277, %278 : vector<8x128xf32>
    %280 = arith.negf %279 : vector<8x128xf32>
    %281 = math.exp %280 : vector<8x128xf32>
    %cst_120 = arith.constant 1.000000e+00 : f32
    %282 = vector.broadcast %cst_120 : f32 to vector<8x128xf32>
    %283 = arith.addf %282, %281 : vector<8x128xf32>
    %284 = arith.divf %282, %283 : vector<8x128xf32>
    %285 = vector.extract_strided_slice %284 {offsets = [0, 0], sizes = [8, 32], strides = [1, 1]} : vector<8x128xf32> to vector<8x32xf32>
    %286 = vector.extract_strided_slice %284 {offsets = [0, 32], sizes = [8, 32], strides = [1, 1]} : vector<8x128xf32> to vector<8x32xf32>
    %287 = vector.extract_strided_slice %284 {offsets = [0, 64], sizes = [8, 32], strides = [1, 1]} : vector<8x128xf32> to vector<8x32xf32>
    %cst_121 = arith.constant 2.000000e+00 : f32
    %288 = vector.broadcast %cst_121 : f32 to vector<8x32xf32>
    %289 = arith.mulf %288, %287 : vector<8x32xf32>
    %cst_122 = arith.constant 1.000000e+00 : f32
    %290 = vector.broadcast %cst_122 : f32 to vector<8x32xf32>
    %291 = arith.subf %289, %290 : vector<8x32xf32>
    %292 = vector.extract_strided_slice %284 {offsets = [0, 96], sizes = [8, 32], strides = [1, 1]} : vector<8x128xf32> to vector<8x32xf32>
    %293 = arith.mulf %286, %274 : vector<8x32xf32>
    %294 = arith.mulf %285, %291 : vector<8x32xf32>
    %295 = arith.addf %293, %294 : vector<8x32xf32>
    %296 = math.tanh %295 : vector<8x32xf32>
    %297 = arith.mulf %292, %296 : vector<8x32xf32>
    %c5 = arith.constant 5 : index
    %c0_123 = arith.constant 0 : index
    %c0_124 = arith.constant 0 : index
    %298 = vector.load %arg2[%c5, %c0_123, %c0_124] : memref<8x8x32xf32, #tpu.memory_space<vmem>>, vector<1x8x32xf32>
    %299 = vector.shape_cast %298 : vector<1x8x32xf32> to vector<8x32xf32>
    %300 = arith.mulf %297, %299 : vector<8x32xf32>
    %301 = arith.maximumf %234, %300 : vector<8x32xf32>
    %302 = arith.mulf %295, %299 : vector<8x32xf32>
    %303 = arith.maximumf %236, %302 : vector<8x32xf32>
    %c48 = arith.constant 48 : index
    %c0_125 = arith.constant 0 : index
    %c0_126 = arith.constant 0 : index
    %304 = vector.load %arg1[%c48, %c0_125, %c0_126] : memref<64x8x32xf32, #tpu.memory_space<vmem>>, vector<1x8x32xf32>
    %305 = vector.shape_cast %304 : vector<1x8x32xf32> to vector<8x32xf32>
    %306 = arith.mulf %305, %42 : vector<8x32xf32>
    %c49 = arith.constant 49 : index
    %c0_127 = arith.constant 0 : index
    %c0_128 = arith.constant 0 : index
    %307 = vector.load %arg1[%c49, %c0_127, %c0_128] : memref<64x8x32xf32, #tpu.memory_space<vmem>>, vector<1x8x32xf32>
    %308 = vector.shape_cast %307 : vector<1x8x32xf32> to vector<8x32xf32>
    %309 = arith.mulf %308, %77 : vector<8x32xf32>
    %c50 = arith.constant 50 : index
    %c0_129 = arith.constant 0 : index
    %c0_130 = arith.constant 0 : index
    %310 = vector.load %arg1[%c50, %c0_129, %c0_130] : memref<64x8x32xf32, #tpu.memory_space<vmem>>, vector<1x8x32xf32>
    %311 = vector.shape_cast %310 : vector<1x8x32xf32> to vector<8x32xf32>
    %312 = arith.mulf %311, %120 : vector<8x32xf32>
    %c51 = arith.constant 51 : index
    %c0_131 = arith.constant 0 : index
    %c0_132 = arith.constant 0 : index
    %313 = vector.load %arg1[%c51, %c0_131, %c0_132] : memref<64x8x32xf32, #tpu.memory_space<vmem>>, vector<1x8x32xf32>
    %314 = vector.shape_cast %313 : vector<1x8x32xf32> to vector<8x32xf32>
    %315 = arith.mulf %314, %171 : vector<8x32xf32>
    %c52 = arith.constant 52 : index
    %c0_133 = arith.constant 0 : index
    %c0_134 = arith.constant 0 : index
    %316 = vector.load %arg1[%c52, %c0_133, %c0_134] : memref<64x8x32xf32, #tpu.memory_space<vmem>>, vector<1x8x32xf32>
    %317 = vector.shape_cast %316 : vector<1x8x32xf32> to vector<8x32xf32>
    %318 = arith.mulf %317, %230 : vector<8x32xf32>
    %c53 = arith.constant 53 : index
    %c0_135 = arith.constant 0 : index
    %c0_136 = arith.constant 0 : index
    %319 = vector.load %arg1[%c53, %c0_135, %c0_136] : memref<64x8x32xf32, #tpu.memory_space<vmem>>, vector<1x8x32xf32>
    %320 = vector.shape_cast %319 : vector<1x8x32xf32> to vector<8x32xf32>
    %321 = arith.mulf %320, %297 : vector<8x32xf32>
    %322 = arith.addf %306, %309 : vector<8x32xf32>
    %323 = arith.addf %312, %315 : vector<8x32xf32>
    %324 = arith.addf %318, %321 : vector<8x32xf32>
    %325 = arith.addf %322, %323 : vector<8x32xf32>
    %326 = arith.addf %325, %324 : vector<8x32xf32>
    %c48_137 = arith.constant 48 : index
    %c0_138 = arith.constant 0 : index
    %c0_139 = arith.constant 0 : index
    %327 = vector.load %arg1[%c48_137, %c0_138, %c0_139] : memref<64x8x32xf32, #tpu.memory_space<vmem>>, vector<1x8x32xf32>
    %328 = vector.shape_cast %327 : vector<1x8x32xf32> to vector<8x32xf32>
    %329 = arith.mulf %328, %40 : vector<8x32xf32>
    %c49_140 = arith.constant 49 : index
    %c0_141 = arith.constant 0 : index
    %c0_142 = arith.constant 0 : index
    %330 = vector.load %arg1[%c49_140, %c0_141, %c0_142] : memref<64x8x32xf32, #tpu.memory_space<vmem>>, vector<1x8x32xf32>
    %331 = vector.shape_cast %330 : vector<1x8x32xf32> to vector<8x32xf32>
    %332 = arith.mulf %331, %75 : vector<8x32xf32>
    %c50_143 = arith.constant 50 : index
    %c0_144 = arith.constant 0 : index
    %c0_145 = arith.constant 0 : index
    %333 = vector.load %arg1[%c50_143, %c0_144, %c0_145] : memref<64x8x32xf32, #tpu.memory_space<vmem>>, vector<1x8x32xf32>
    %334 = vector.shape_cast %333 : vector<1x8x32xf32> to vector<8x32xf32>
    %335 = arith.mulf %334, %118 : vector<8x32xf32>
    %c51_146 = arith.constant 51 : index
    %c0_147 = arith.constant 0 : index
    %c0_148 = arith.constant 0 : index
    %336 = vector.load %arg1[%c51_146, %c0_147, %c0_148] : memref<64x8x32xf32, #tpu.memory_space<vmem>>, vector<1x8x32xf32>
    %337 = vector.shape_cast %336 : vector<1x8x32xf32> to vector<8x32xf32>
    %338 = arith.mulf %337, %169 : vector<8x32xf32>
    %c52_149 = arith.constant 52 : index
    %c0_150 = arith.constant 0 : index
    %c0_151 = arith.constant 0 : index
    %339 = vector.load %arg1[%c52_149, %c0_150, %c0_151] : memref<64x8x32xf32, #tpu.memory_space<vmem>>, vector<1x8x32xf32>
    %340 = vector.shape_cast %339 : vector<1x8x32xf32> to vector<8x32xf32>
    %341 = arith.mulf %340, %228 : vector<8x32xf32>
    %c53_152 = arith.constant 53 : index
    %c0_153 = arith.constant 0 : index
    %c0_154 = arith.constant 0 : index
    %342 = vector.load %arg1[%c53_152, %c0_153, %c0_154] : memref<64x8x32xf32, #tpu.memory_space<vmem>>, vector<1x8x32xf32>
    %343 = vector.shape_cast %342 : vector<1x8x32xf32> to vector<8x32xf32>
    %344 = arith.mulf %343, %295 : vector<8x32xf32>
    %345 = arith.addf %329, %332 : vector<8x32xf32>
    %346 = arith.addf %335, %338 : vector<8x32xf32>
    %347 = arith.addf %341, %344 : vector<8x32xf32>
    %348 = arith.addf %345, %346 : vector<8x32xf32>
    %349 = arith.addf %348, %347 : vector<8x32xf32>
    %350 = vector.extract_strided_slice %5 {offsets = [48, 0], sizes = [8, 128], strides = [1, 1]} : vector<64x128xf32> to vector<8x128xf32>
    %cst_155 = arith.constant dense<0.000000e+00> : vector<8x128xf32>
    %351 = tpu.matmul %326, %6, %cst_155 {dimension_numbers = #tpu.dot_dimension_numbers<[1], [0], [0], [1], [0, 0, 1, 1], [], []>} : vector<8x32xf32>, vector<32x128xf32>, vector<8x128xf32> -> vector<8x128xf32>
    %352 = arith.addf %350, %351 : vector<8x128xf32>
    %353 = vector.broadcast %15 : vector<1x128xf32> to vector<8x128xf32>
    %354 = arith.mulf %352, %353 : vector<8x128xf32>
    %355 = arith.negf %354 : vector<8x128xf32>
    %356 = math.exp %355 : vector<8x128xf32>
    %cst_156 = arith.constant 1.000000e+00 : f32
    %357 = vector.broadcast %cst_156 : f32 to vector<8x128xf32>
    %358 = arith.addf %357, %356 : vector<8x128xf32>
    %359 = arith.divf %357, %358 : vector<8x128xf32>
    %360 = vector.extract_strided_slice %359 {offsets = [0, 0], sizes = [8, 32], strides = [1, 1]} : vector<8x128xf32> to vector<8x32xf32>
    %361 = vector.extract_strided_slice %359 {offsets = [0, 32], sizes = [8, 32], strides = [1, 1]} : vector<8x128xf32> to vector<8x32xf32>
    %362 = vector.extract_strided_slice %359 {offsets = [0, 64], sizes = [8, 32], strides = [1, 1]} : vector<8x128xf32> to vector<8x32xf32>
    %cst_157 = arith.constant 2.000000e+00 : f32
    %363 = vector.broadcast %cst_157 : f32 to vector<8x32xf32>
    %364 = arith.mulf %363, %362 : vector<8x32xf32>
    %cst_158 = arith.constant 1.000000e+00 : f32
    %365 = vector.broadcast %cst_158 : f32 to vector<8x32xf32>
    %366 = arith.subf %364, %365 : vector<8x32xf32>
    %367 = vector.extract_strided_slice %359 {offsets = [0, 96], sizes = [8, 32], strides = [1, 1]} : vector<8x128xf32> to vector<8x32xf32>
    %368 = arith.mulf %361, %349 : vector<8x32xf32>
    %369 = arith.mulf %360, %366 : vector<8x32xf32>
    %370 = arith.addf %368, %369 : vector<8x32xf32>
    %371 = math.tanh %370 : vector<8x32xf32>
    %372 = arith.mulf %367, %371 : vector<8x32xf32>
    %c6 = arith.constant 6 : index
    %c0_159 = arith.constant 0 : index
    %c0_160 = arith.constant 0 : index
    %373 = vector.load %arg2[%c6, %c0_159, %c0_160] : memref<8x8x32xf32, #tpu.memory_space<vmem>>, vector<1x8x32xf32>
    %374 = vector.shape_cast %373 : vector<1x8x32xf32> to vector<8x32xf32>
    %375 = arith.mulf %372, %374 : vector<8x32xf32>
    %376 = arith.maximumf %301, %375 : vector<8x32xf32>
    %377 = arith.mulf %370, %374 : vector<8x32xf32>
    %378 = arith.maximumf %303, %377 : vector<8x32xf32>
    %c56 = arith.constant 56 : index
    %c0_161 = arith.constant 0 : index
    %c0_162 = arith.constant 0 : index
    %379 = vector.load %arg1[%c56, %c0_161, %c0_162] : memref<64x8x32xf32, #tpu.memory_space<vmem>>, vector<1x8x32xf32>
    %380 = vector.shape_cast %379 : vector<1x8x32xf32> to vector<8x32xf32>
    %381 = arith.mulf %380, %42 : vector<8x32xf32>
    %c57 = arith.constant 57 : index
    %c0_163 = arith.constant 0 : index
    %c0_164 = arith.constant 0 : index
    %382 = vector.load %arg1[%c57, %c0_163, %c0_164] : memref<64x8x32xf32, #tpu.memory_space<vmem>>, vector<1x8x32xf32>
    %383 = vector.shape_cast %382 : vector<1x8x32xf32> to vector<8x32xf32>
    %384 = arith.mulf %383, %77 : vector<8x32xf32>
    %c58 = arith.constant 58 : index
    %c0_165 = arith.constant 0 : index
    %c0_166 = arith.constant 0 : index
    %385 = vector.load %arg1[%c58, %c0_165, %c0_166] : memref<64x8x32xf32, #tpu.memory_space<vmem>>, vector<1x8x32xf32>
    %386 = vector.shape_cast %385 : vector<1x8x32xf32> to vector<8x32xf32>
    %387 = arith.mulf %386, %120 : vector<8x32xf32>
    %c59 = arith.constant 59 : index
    %c0_167 = arith.constant 0 : index
    %c0_168 = arith.constant 0 : index
    %388 = vector.load %arg1[%c59, %c0_167, %c0_168] : memref<64x8x32xf32, #tpu.memory_space<vmem>>, vector<1x8x32xf32>
    %389 = vector.shape_cast %388 : vector<1x8x32xf32> to vector<8x32xf32>
    %390 = arith.mulf %389, %171 : vector<8x32xf32>
    %c60 = arith.constant 60 : index
    %c0_169 = arith.constant 0 : index
    %c0_170 = arith.constant 0 : index
    %391 = vector.load %arg1[%c60, %c0_169, %c0_170] : memref<64x8x32xf32, #tpu.memory_space<vmem>>, vector<1x8x32xf32>
    %392 = vector.shape_cast %391 : vector<1x8x32xf32> to vector<8x32xf32>
    %393 = arith.mulf %392, %230 : vector<8x32xf32>
    %c61 = arith.constant 61 : index
    %c0_171 = arith.constant 0 : index
    %c0_172 = arith.constant 0 : index
    %394 = vector.load %arg1[%c61, %c0_171, %c0_172] : memref<64x8x32xf32, #tpu.memory_space<vmem>>, vector<1x8x32xf32>
    %395 = vector.shape_cast %394 : vector<1x8x32xf32> to vector<8x32xf32>
    %396 = arith.mulf %395, %297 : vector<8x32xf32>
    %c62 = arith.constant 62 : index
    %c0_173 = arith.constant 0 : index
    %c0_174 = arith.constant 0 : index
    %397 = vector.load %arg1[%c62, %c0_173, %c0_174] : memref<64x8x32xf32, #tpu.memory_space<vmem>>, vector<1x8x32xf32>
    %398 = vector.shape_cast %397 : vector<1x8x32xf32> to vector<8x32xf32>
    %399 = arith.mulf %398, %372 : vector<8x32xf32>
    %400 = arith.addf %381, %384 : vector<8x32xf32>
    %401 = arith.addf %387, %390 : vector<8x32xf32>
    %402 = arith.addf %393, %396 : vector<8x32xf32>
    %403 = arith.addf %400, %401 : vector<8x32xf32>
    %404 = arith.addf %402, %399 : vector<8x32xf32>
    %405 = arith.addf %403, %404 : vector<8x32xf32>
    %c56_175 = arith.constant 56 : index
    %c0_176 = arith.constant 0 : index
    %c0_177 = arith.constant 0 : index
    %406 = vector.load %arg1[%c56_175, %c0_176, %c0_177] : memref<64x8x32xf32, #tpu.memory_space<vmem>>, vector<1x8x32xf32>
    %407 = vector.shape_cast %406 : vector<1x8x32xf32> to vector<8x32xf32>
    %408 = arith.mulf %407, %40 : vector<8x32xf32>
    %c57_178 = arith.constant 57 : index
    %c0_179 = arith.constant 0 : index
    %c0_180 = arith.constant 0 : index
    %409 = vector.load %arg1[%c57_178, %c0_179, %c0_180] : memref<64x8x32xf32, #tpu.memory_space<vmem>>, vector<1x8x32xf32>
    %410 = vector.shape_cast %409 : vector<1x8x32xf32> to vector<8x32xf32>
    %411 = arith.mulf %410, %75 : vector<8x32xf32>
    %c58_181 = arith.constant 58 : index
    %c0_182 = arith.constant 0 : index
    %c0_183 = arith.constant 0 : index
    %412 = vector.load %arg1[%c58_181, %c0_182, %c0_183] : memref<64x8x32xf32, #tpu.memory_space<vmem>>, vector<1x8x32xf32>
    %413 = vector.shape_cast %412 : vector<1x8x32xf32> to vector<8x32xf32>
    %414 = arith.mulf %413, %118 : vector<8x32xf32>
    %c59_184 = arith.constant 59 : index
    %c0_185 = arith.constant 0 : index
    %c0_186 = arith.constant 0 : index
    %415 = vector.load %arg1[%c59_184, %c0_185, %c0_186] : memref<64x8x32xf32, #tpu.memory_space<vmem>>, vector<1x8x32xf32>
    %416 = vector.shape_cast %415 : vector<1x8x32xf32> to vector<8x32xf32>
    %417 = arith.mulf %416, %169 : vector<8x32xf32>
    %c60_187 = arith.constant 60 : index
    %c0_188 = arith.constant 0 : index
    %c0_189 = arith.constant 0 : index
    %418 = vector.load %arg1[%c60_187, %c0_188, %c0_189] : memref<64x8x32xf32, #tpu.memory_space<vmem>>, vector<1x8x32xf32>
    %419 = vector.shape_cast %418 : vector<1x8x32xf32> to vector<8x32xf32>
    %420 = arith.mulf %419, %228 : vector<8x32xf32>
    %c61_190 = arith.constant 61 : index
    %c0_191 = arith.constant 0 : index
    %c0_192 = arith.constant 0 : index
    %421 = vector.load %arg1[%c61_190, %c0_191, %c0_192] : memref<64x8x32xf32, #tpu.memory_space<vmem>>, vector<1x8x32xf32>
    %422 = vector.shape_cast %421 : vector<1x8x32xf32> to vector<8x32xf32>
    %423 = arith.mulf %422, %295 : vector<8x32xf32>
    %c62_193 = arith.constant 62 : index
    %c0_194 = arith.constant 0 : index
    %c0_195 = arith.constant 0 : index
    %424 = vector.load %arg1[%c62_193, %c0_194, %c0_195] : memref<64x8x32xf32, #tpu.memory_space<vmem>>, vector<1x8x32xf32>
    %425 = vector.shape_cast %424 : vector<1x8x32xf32> to vector<8x32xf32>
    %426 = arith.mulf %425, %370 : vector<8x32xf32>
    %427 = arith.addf %408, %411 : vector<8x32xf32>
    %428 = arith.addf %414, %417 : vector<8x32xf32>
    %429 = arith.addf %420, %423 : vector<8x32xf32>
    %430 = arith.addf %427, %428 : vector<8x32xf32>
    %431 = arith.addf %429, %426 : vector<8x32xf32>
    %432 = arith.addf %430, %431 : vector<8x32xf32>
    %433 = vector.extract_strided_slice %5 {offsets = [56, 0], sizes = [8, 128], strides = [1, 1]} : vector<64x128xf32> to vector<8x128xf32>
    %cst_196 = arith.constant dense<0.000000e+00> : vector<8x128xf32>
    %434 = tpu.matmul %405, %6, %cst_196 {dimension_numbers = #tpu.dot_dimension_numbers<[1], [0], [0], [1], [0, 0, 1, 1], [], []>} : vector<8x32xf32>, vector<32x128xf32>, vector<8x128xf32> -> vector<8x128xf32>
    %435 = arith.addf %433, %434 : vector<8x128xf32>
    %436 = vector.broadcast %15 : vector<1x128xf32> to vector<8x128xf32>
    %437 = arith.mulf %435, %436 : vector<8x128xf32>
    %438 = arith.negf %437 : vector<8x128xf32>
    %439 = math.exp %438 : vector<8x128xf32>
    %cst_197 = arith.constant 1.000000e+00 : f32
    %440 = vector.broadcast %cst_197 : f32 to vector<8x128xf32>
    %441 = arith.addf %440, %439 : vector<8x128xf32>
    %442 = arith.divf %440, %441 : vector<8x128xf32>
    %443 = vector.extract_strided_slice %442 {offsets = [0, 0], sizes = [8, 32], strides = [1, 1]} : vector<8x128xf32> to vector<8x32xf32>
    %444 = vector.extract_strided_slice %442 {offsets = [0, 32], sizes = [8, 32], strides = [1, 1]} : vector<8x128xf32> to vector<8x32xf32>
    %445 = vector.extract_strided_slice %442 {offsets = [0, 64], sizes = [8, 32], strides = [1, 1]} : vector<8x128xf32> to vector<8x32xf32>
    %cst_198 = arith.constant 2.000000e+00 : f32
    %446 = vector.broadcast %cst_198 : f32 to vector<8x32xf32>
    %447 = arith.mulf %446, %445 : vector<8x32xf32>
    %cst_199 = arith.constant 1.000000e+00 : f32
    %448 = vector.broadcast %cst_199 : f32 to vector<8x32xf32>
    %449 = arith.subf %447, %448 : vector<8x32xf32>
    %450 = vector.extract_strided_slice %442 {offsets = [0, 96], sizes = [8, 32], strides = [1, 1]} : vector<8x128xf32> to vector<8x32xf32>
    %451 = arith.mulf %444, %432 : vector<8x32xf32>
    %452 = arith.mulf %443, %449 : vector<8x32xf32>
    %453 = arith.addf %451, %452 : vector<8x32xf32>
    %454 = math.tanh %453 : vector<8x32xf32>
    %455 = arith.mulf %450, %454 : vector<8x32xf32>
    %c7 = arith.constant 7 : index
    %c0_200 = arith.constant 0 : index
    %c0_201 = arith.constant 0 : index
    %456 = vector.load %arg2[%c7, %c0_200, %c0_201] : memref<8x8x32xf32, #tpu.memory_space<vmem>>, vector<1x8x32xf32>
    %457 = vector.shape_cast %456 : vector<1x8x32xf32> to vector<8x32xf32>
    %458 = arith.mulf %455, %457 : vector<8x32xf32>
    %459 = arith.maximumf %376, %458 : vector<8x32xf32>
    %460 = arith.mulf %453, %457 : vector<8x32xf32>
    %461 = arith.maximumf %378, %460 : vector<8x32xf32>
    %462 = tpu.concatenate %45, %80, %123, %174, %233, %300, %375, %458 in 0 : vector<8x32xf32>, vector<8x32xf32>, vector<8x32xf32>, vector<8x32xf32>, vector<8x32xf32>, vector<8x32xf32>, vector<8x32xf32>, vector<8x32xf32> -> vector<64x32xf32>
    %c0_202 = arith.constant 0 : index
    %c0_203 = arith.constant 0 : index
    %463 = vector.load %arg7[%c0_202, %c0_203] : memref<64x32xf32, #tpu.memory_space<vmem>>, vector<64x32xf32>
    tpu.vector_store %arg7[%c0_202, %c0_203], %462 {strides = array<i32>} : memref<64x32xf32, #tpu.memory_space<vmem>>, vector<64x32xf32>,
    %c0_204 = arith.constant 0 : index
    %c0_205 = arith.constant 0 : index
    %464 = vector.load %arg6[%c0_204, %c0_205] : memref<32x32xf32, #tpu.memory_space<vmem>>, vector<32x32xf32>
    %cst_206 = arith.constant dense<0.000000e+00> : vector<64x32xf32>
    %465 = tpu.matmul %462, %464, %cst_206 {dimension_numbers = #tpu.dot_dimension_numbers<[1], [0], [0], [1], [0, 0, 1, 1], [], []>} : vector<64x32xf32>, vector<32x32xf32>, vector<64x32xf32> -> vector<64x32xf32>
    %c0_207 = arith.constant 0 : index
    %c0_208 = arith.constant 0 : index
    %466 = vector.load %arg8[%c0_207, %c0_208] : memref<64x32xf32, #tpu.memory_space<vmem>>, vector<64x32xf32>
    tpu.vector_store %arg8[%c0_207, %c0_208], %465 {strides = array<i32>} : memref<64x32xf32, #tpu.memory_space<vmem>>, vector<64x32xf32>,
    %c0_209 = arith.constant 0 : index
    %c0_210 = arith.constant 0 : index
    %467 = vector.load %arg9[%c0_209, %c0_210] : memref<8x32xf32, #tpu.memory_space<vmem>>, vector<8x32xf32>
    tpu.vector_store %arg9[%c0_209, %c0_210], %459 {strides = array<i32>} : memref<8x32xf32, #tpu.memory_space<vmem>>, vector<8x32xf32>,
    %c0_211 = arith.constant 0 : index
    %c0_212 = arith.constant 0 : index
    %468 = vector.load %arg10[%c0_211, %c0_212] : memref<8x32xf32, #tpu.memory_space<vmem>>, vector<8x32xf32>
    tpu.vector_store %arg10[%c0_211, %c0_212], %461 {strides = array<i32>} : memref<8x32xf32, #tpu.memory_space<vmem>>, vector<8x32xf32>,
    return
  }
}

</mosaic_0001>

<llo_original>
// kernel: tpu_custom_call.1
$region0: #{tpu_custom_call.1}
  #allocation0 [shape = 'u32[]', space=smem, size = 0x4, offset = 0x4, fixed_abs, tag = 'smem constant byte address 0x4 - core index']
  #allocation1 [shape = 'u32[144,128]{1,0:T(1,128)}', space=vmem, size = 0x12000, scoped, tag = 'internal scratch']
  %s0 = inlined_call_operand.vmem [shape: f32[64,32], index: 0, kind: input, shape index: {}]
  %s1 = inlined_call_operand.vmem [shape: f32[64,8,32], index: 1, kind: input, shape index: {}]
  %s2 = inlined_call_operand.vmem [shape: f32[8,8,32], index: 2, kind: input, shape index: {}]
  %s3 = inlined_call_operand.vmem [shape: f32[32,128], index: 3, kind: input, shape index: {}]
  %s4 = inlined_call_operand.vmem [shape: f32[32,128], index: 4, kind: input, shape index: {}]
  %s5 = inlined_call_operand.vmem [shape: f32[1,128], index: 5, kind: input, shape index: {}]
  %s6 = inlined_call_operand.vmem [shape: f32[32,32], index: 6, kind: input, shape index: {}]
  %s7 = inlined_call_operand.vmem [shape: f32[64,32], index: 7, kind: output, shape index: {0}]
  %s8 = inlined_call_operand.vmem [shape: f32[64,32], index: 8, kind: output, shape index: {1}]
  %s9 = inlined_call_operand.hbm [shape: f32[8,32], index: 9, kind: output, shape index: {2}]
  %s10 = inlined_call_operand.hbm [shape: f32[8,32], index: 10, kind: output, shape index: {3}]
  %11 = xla_tuple %s7, %s8, %s9, %s10
  %s12 = sld [smem:[#allocation0]]
  $region62: #{tpu_custom_call.1} parent=0
    _
  %s14 = ssub.s32 1, %s12
  %s15 = scalar_select 0, %s14, %s12
  $region1: #{tpu_custom_call.1} parent=0
    #allocation2 [shape = 'u8[4096]{0}', space=vmem, size = 0x1000, scoped, tag = 'output window, operand 2, single buffered']
    #allocation3 [shape = 's32[1]{0}', space=sflag, size = 0x4, scoped, tag = 'scoped memory for tpu_custom_call.1']
    #allocation4 [shape = 'u8[4096]{0}', space=vmem, size = 0x1000, scoped, tag = 'output window, operand 3, single buffered']
    #allocation5 [shape = 's32[1]{0}', space=sflag, size = 0x4, scoped, tag = 'scoped memory for tpu_custom_call.1']
    %16 = vsyncpa [#allocation3], 0
    %17 = vsyncpa [#allocation5], 0
    // Predicated region
    $region2: #{tpu_custom_call.1} parent=1 // pred_check
      _
    $region3: #{tpu_custom_call.1} parent=1 // pred_check_branch
      %19 = sbr.rel (0) target = $region5
    $region4: #{tpu_custom_call.1} parent=1 // pred_region
      _
    $region5: #{tpu_custom_call.1} parent=1 // pred_fallthru
      _
    // Predicated region
    $region6: #{tpu_custom_call.1} parent=1 // pred_check
      _
    $region7: #{tpu_custom_call.1} parent=1 // pred_check_branch
      %21 = sbr.rel (0) target = $region9
    $region8: #{tpu_custom_call.1} parent=1 // pred_region
      _
    $region9: #{tpu_custom_call.1} parent=1 // pred_fallthru
      _
    // Predicated region
    $region10: #{tpu_custom_call.1} parent=1 // pred_check
      _
    $region11: #{tpu_custom_call.1} parent=1 // pred_check_branch
      %23 = sbr.rel (0) target = $region13
    $region12: #{tpu_custom_call.1} parent=1 // pred_region
      _
    $region13: #{tpu_custom_call.1} parent=1 // pred_fallthru
      _
    // Predicated region
    $region14: #{tpu_custom_call.1} parent=1 // pred_check
      _
    $region15: #{tpu_custom_call.1} parent=1 // pred_check_branch
      %25 = sbr.rel (0) target = $region17
    $region16: #{tpu_custom_call.1} parent=1 // pred_region
      _
    $region17: #{tpu_custom_call.1} parent=1 // pred_fallthru
      _
    // Predicated region
    $region18: #{tpu_custom_call.1} parent=1 // pred_check
      _
    $region19: #{tpu_custom_call.1} parent=1 // pred_check_branch
      %27 = sbr.rel (0) target = $region21
    $region20: #{tpu_custom_call.1} parent=1 // pred_region
      _
    $region21: #{tpu_custom_call.1} parent=1 // pred_fallthru
      _
    // Predicated region
    $region22: #{tpu_custom_call.1} parent=1 // pred_check
      _
    $region23: #{tpu_custom_call.1} parent=1 // pred_check_branch
      %29 = sbr.rel (0) target = $region25
    $region24: #{tpu_custom_call.1} parent=1 // pred_region
      _
    $region25: #{tpu_custom_call.1} parent=1 // pred_fallthru
      _
    // Predicated region
    $region26: #{tpu_custom_call.1} parent=1 // pred_check
      _
    $region27: #{tpu_custom_call.1} parent=1 // pred_check_branch
      %31 = sbr.rel (0) target = $region29
    $region28: #{tpu_custom_call.1} parent=1 // pred_region
      _
    $region29: #{tpu_custom_call.1} parent=1 // pred_fallthru
      _
    %v32 = vld [vmem:[%s0] sm:$0xff]
    %v33 = vld [vmem:[%s0 + $0x8] sm:$0xff]
    %v34 = vld [vmem:[%s0 + $0x10] sm:$0xff]
    %v35 = vld [vmem:[%s0 + $0x18] sm:$0xff]
    %v36 = vld [vmem:[%s0 + $0x20] sm:$0xff]
    %v37 = vld [vmem:[%s0 + $0x28] sm:$0xff]
    %v38 = vld [vmem:[%s0 + $0x30] sm:$0xff]
    %v39 = vld [vmem:[%s0 + $0x38] sm:$0xff]
    %v40 = vld [vmem:[%s3] sm:$0xff]
    %v41 = vld [vmem:[%s3 + $0x8] sm:$0xff]
    %v42 = vld [vmem:[%s3 + $0x10] sm:$0xff]
    %v43 = vld [vmem:[%s3 + $0x18] sm:$0xff]
    %v44 = vld [vmem:[%s5] sm:$0x1]
    %v46 = vlaneseq
    %v47 = vshrl.u32 %v46, 7
    %v48 = vsub.s32 0, %v47
    %v49 = vrot.slane %v44, %v48
    %vm51 = vcmask 261120
    %v53 = vsel %vm51, %v32, 0
    %v56 = vsel %vm51, %v33, 0
    %v59 = vsel %vm51, %v34, 0
    %v62 = vsel %vm51, %v35, 0
    %v65 = vsel %vm51, %v36, 0
    %v68 = vsel %vm51, %v37, 0
    %v71 = vsel %vm51, %v38, 0
    %v74 = vsel %vm51, %v39, 0
    %76 = vmatprep.subr.mxu0 0.0
    %77 = vmatpush1.msra.mxu0 0.0
    %78 = vmatprep.subr.mxu0 0.0
    %79 = vmatpush1.msra.mxu0 0.0
    %80 = vmatprep.subr.mxu0 0.0
    %81 = vmatpush1.msra.mxu0 0.0
    %82 = vmatprep.subr.mxu0 0.0
    %83 = vmatpush1.msra.mxu0 0.0
    %84 = vmatprep.subr.mxu0 0.0
    %85 = vmatpush1.msra.mxu0 0.0
    %86 = vmatprep.subr.mxu0 0.0
    %87 = vmatpush1.msra.mxu0 0.0
    %88 = vmatprep.subr.mxu0 0.0
    %89 = vmatpush1.msra.mxu0 0.0
    %90 = vmatprep.subr.mxu0 0.0
    %91 = vmatpush1.msra.mxu0 0.0
    %92 = vmatprep.subr.mxu0 0.0
    %93 = vmatpush1.msra.mxu0 0.0
    %94 = vmatprep.subr.mxu0 0.0
    %95 = vmatpush1.msra.mxu0 0.0
    %96 = vmatprep.subr.mxu0 0.0
    %97 = vmatpush1.msra.mxu0 0.0
    %98 = vmatprep.subr.mxu0 0.0
    %99 = vmatpush1.msra.mxu0 0.0
    %100 = vmatprep.subr.mxu0 0.0
    %101 = vmatpush1.msra.mxu0 %v43
    %102 = vmatprep.subr.mxu0 0.0
    %103 = vmatpush1.msra.mxu0 %v42
    %104 = vmatprep.subr.mxu0 0.0
    %105 = vmatpush1.msra.mxu0 %v41
    %106 = vmatprep.subr.mxu0 0.0
    %107 = vmatpush1.msra.mxu0 %v40
    %108 = vmatprep.subr.mxu0 0.0
    %109 = vmatpush2.msra.mxu0 0.0
    %110 = vmatprep.subr.mxu0 0.0
    %111 = vmatpush2.msra.mxu0 0.0
    %112 = vmatprep.subr.mxu0 0.0
    %113 = vmatpush2.msra.mxu0 0.0
    %114 = vmatprep.subr.mxu0 0.0
    %115 = vmatpush2.msra.mxu0 0.0
    %116 = vmatprep.subr.mxu0 0.0
    %117 = vmatpush2.msra.mxu0 0.0
    %118 = vmatprep.subr.mxu0 0.0
    %119 = vmatpush2.msra.mxu0 0.0
    %120 = vmatprep.subr.mxu0 0.0
    %121 = vmatpush2.msra.mxu0 0.0
    %122 = vmatprep.subr.mxu0 0.0
    %123 = vmatpush2.msra.mxu0 0.0
    %124 = vmatprep.subr.mxu0 0.0
    %125 = vmatpush2.msra.mxu0 0.0
    %126 = vmatprep.subr.mxu0 0.0
    %127 = vmatpush2.msra.mxu0 0.0
    %128 = vmatprep.subr.mxu0 0.0
    %129 = vmatpush2.msra.mxu0 0.0
    %130 = vmatprep.subr.mxu0 0.0
    %131 = vmatpush2.msra.mxu0 0.0
    %132 = vmatprep.subr.mxu0 0.0
    %133 = vmatpush2.msra.mxu0 0.0
    %134 = vmatprep.subr.mxu0 0.0
    %135 = vmatpush2.msra.mxu0 0.0
    %136 = vmatprep.subr.mxu0 0.0
    %137 = vmatpush2.msra.mxu0 0.0
    %138 = vmatprep.subr.mxu0 0.0
    %139 = vmatpush2.msra.mxu0 0.0
    %140 = vmatprep.mubr.f32.mxu0 0.0
    %141 = vmatmul.mubr.f32.gmra.mxu0 %v53
    %v142 = vpop.f32.mrf.mxu0
    %v143 = vadd.f32 %v49, %v142
    %v144 = vpop.f32.mrf.mxu0
    %145 = vmatprep.mubr.f32.mxu0 0.0
    %146 = vmatmul.mubr.f32.gmra.mxu0 %v56
    %v147 = vpop.f32.mrf.mxu0
    %v148 = vadd.f32 %v49, %v147
    %v149 = vpop.f32.mrf.mxu0
    %150 = vmatprep.mubr.f32.mxu0 0.0
    %151 = vmatmul.mubr.f32.gmra.mxu0 %v59
    %v152 = vpop.f32.mrf.mxu0
    %v153 = vadd.f32 %v49, %v152
    %v154 = vpop.f32.mrf.mxu0
    %155 = vmatprep.mubr.f32.mxu0 0.0
    %156 = vmatmul.mubr.f32.gmra.mxu0 %v62
    %v157 = vpop.f32.mrf.mxu0
    %v158 = vadd.f32 %v49, %v157
    %v159 = vpop.f32.mrf.mxu0
    %160 = vmatprep.mubr.f32.mxu0 0.0
    %161 = vmatmul.mubr.f32.gmra.mxu0 %v65
    %v162 = vpop.f32.mrf.mxu0
    %v163 = vadd.f32 %v49, %v162
    %v164 = vpop.f32.mrf.mxu0
    %165 = vmatprep.mubr.f32.mxu0 0.0
    %166 = vmatmul.mubr.f32.gmra.mxu0 %v68
    %v167 = vpop.f32.mrf.mxu0
    %v168 = vadd.f32 %v49, %v167
    %v169 = vpop.f32.mrf.mxu0
    %170 = vmatprep.mubr.f32.mxu0 0.0
    %171 = vmatmul.mubr.f32.gmra.mxu0 %v71
    %v172 = vpop.f32.mrf.mxu0
    %v173 = vadd.f32 %v49, %v172
    %v174 = vpop.f32.mrf.mxu0
    %175 = vmatprep.mubr.f32.mxu0 0.0
    %176 = vmatmul.mubr.f32.gmra.mxu0 %v74
    %v177 = vpop.f32.mrf.mxu0
    %v178 = vadd.f32 %v49, %v177
    %v179 = vpop.f32.mrf.mxu0
    %180 = vdwg.mxu0
    %v181 = vld [vmem:[%s4] sm:$0xff]
    %v182 = vld [vmem:[%s4 + $0x8] sm:$0xff]
    %v183 = vld [vmem:[%s4 + $0x10] sm:$0xff]
    %v184 = vld [vmem:[%s4 + $0x18] sm:$0xff]
    %v185 = vlaneseq
    %v186 = vand.u32 %v185, 127
    %vm187 = vcmp.ge.s32.totalorder %v186, 64
    %vm188 = vcmp.lt.s32.totalorder %v186, 96
    %vm189 = vmand %vm187, %vm188
    %v190 = vsel %vm189, 2.0, 1.0
    %v192 = vsel %vm51, 0.0, 0
    %194 = vmatprep.subr.mxu0 0.0
    %195 = vmatpush1.msra.mxu0 0.0
    %196 = vmatprep.subr.mxu0 0.0
    %197 = vmatpush1.msra.mxu0 0.0
    %198 = vmatprep.subr.mxu0 0.0
    %199 = vmatpush1.msra.mxu0 0.0
    %200 = vmatprep.subr.mxu0 0.0
    %201 = vmatpush1.msra.mxu0 0.0
    %202 = vmatprep.subr.mxu0 0.0
    %203 = vmatpush1.msra.mxu0 0.0
    %204 = vmatprep.subr.mxu0 0.0
    %205 = vmatpush1.msra.mxu0 0.0
    %206 = vmatprep.subr.mxu0 0.0
    %207 = vmatpush1.msra.mxu0 0.0
    %208 = vmatprep.subr.mxu0 0.0
    %209 = vmatpush1.msra.mxu0 0.0
    %210 = vmatprep.subr.mxu0 0.0
    %211 = vmatpush1.msra.mxu0 0.0
    %212 = vmatprep.subr.mxu0 0.0
    %213 = vmatpush1.msra.mxu0 0.0
    %214 = vmatprep.subr.mxu0 0.0
    %215 = vmatpush1.msra.mxu0 0.0
    %216 = vmatprep.subr.mxu0 0.0
    %217 = vmatpush1.msra.mxu0 0.0
    %218 = vmatprep.subr.mxu0 0.0
    %219 = vmatpush1.msra.mxu0 %v184
    %220 = vmatprep.subr.mxu0 0.0
    %221 = vmatpush1.msra.mxu0 %v183
    %222 = vmatprep.subr.mxu0 0.0
    %223 = vmatpush1.msra.mxu0 %v182
    %224 = vmatprep.subr.mxu0 0.0
    %225 = vmatpush1.msra.mxu0 %v181
    %226 = vmatprep.subr.mxu0 0.0
    %227 = vmatpush2.msra.mxu0 0.0
    %228 = vmatprep.subr.mxu0 0.0
    %229 = vmatpush2.msra.mxu0 0.0
    %230 = vmatprep.subr.mxu0 0.0
    %231 = vmatpush2.msra.mxu0 0.0
    %232 = vmatprep.subr.mxu0 0.0
    %233 = vmatpush2.msra.mxu0 0.0
    %234 = vmatprep.subr.mxu0 0.0
    %235 = vmatpush2.msra.mxu0 0.0
    %236 = vmatprep.subr.mxu0 0.0
    %237 = vmatpush2.msra.mxu0 0.0
    %238 = vmatprep.subr.mxu0 0.0
    %239 = vmatpush2.msra.mxu0 0.0
    %240 = vmatprep.subr.mxu0 0.0
    %241 = vmatpush2.msra.mxu0 0.0
    %242 = vmatprep.subr.mxu0 0.0
    %243 = vmatpush2.msra.mxu0 0.0
    %244 = vmatprep.subr.mxu0 0.0
    %245 = vmatpush2.msra.mxu0 0.0
    %246 = vmatprep.subr.mxu0 0.0
    %247 = vmatpush2.msra.mxu0 0.0
    %248 = vmatprep.subr.mxu0 0.0
    %249 = vmatpush2.msra.mxu0 0.0
    %250 = vmatprep.subr.mxu0 0.0
    %251 = vmatpush2.msra.mxu0 0.0
    %252 = vmatprep.subr.mxu0 0.0
    %253 = vmatpush2.msra.mxu0 0.0
    %254 = vmatprep.subr.mxu0 0.0
    %255 = vmatpush2.msra.mxu0 0.0
    %256 = vmatprep.subr.mxu0 0.0
    %257 = vmatpush2.msra.mxu0 0.0
    %258 = vmatprep.mubr.f32.mxu0 0.0
    %259 = vmatmul.mubr.f32.gmra.mxu0 %v192
    %v260 = vpop.f32.mrf.mxu0
    %v261 = vadd.f32 0.0, %v260
    %v262 = vpop.f32.mrf.mxu0
    %263 = vdwg.mxu0
    %v264 = vadd.f32 %v143, %v261
    %v265 = vmul.f32 %v264, %v190
    %v266 = vxor.u32 %v265, 2147483648
    %v267 = vmul.f32 %v266, 1.442695
    %v268 = vpow.pop %v267
    %v269 = vadd.f32 %v268, 1.0
    %v270 = vrcp.pop %v269
    %v271 = vmul.f32 1.0, %v270
    %v272 = vmul.f32 %v271, 2.0
    %v273 = vsub.f32 %v272, 1.0
    %v274 = vmul.f32 %v271, 0.0
    %276 = vrot.lane.b32.xlu0 %v273, 64
    %v277 = vpop.permute.xlu0 %276
    %v279 = vmul.f32 %v271, %v277
    %281 = vrot.lane.b32.xlu0 %v279, 32
    %v282 = vpop.permute.xlu0 %281
    %v284 = vadd.f32 %v274, %v282
    %v285 = vtanh.pop %v284
    %287 = vrot.lane.b32.xlu0 %v285, 64
    %v288 = vpop.permute.xlu0 %287
    %v290 = vmul.f32 %v271, %v288
    %v291 = vld [vmem:[%s2] sm:$0xff]
    %293 = vrot.lane.b32.xlu0 %v291, 96
    %v294 = vpop.permute.xlu0 %293
    %v296 = vmul.f32 %v290, %v294
    %297 = vrot.lane.b32.xlu0 %v291, 32
    %v298 = vpop.permute.xlu0 %297
    %v300 = vmul.f32 %v284, %v298
    %s301 = scalar_lea.vmem %s1, 64
    %v302 = vld [vmem:[%s301] sm:$0xff]
    %304 = vrot.lane.b32.xlu0 %v290, 32
    %v305 = vpop.permute.xlu0 %304
    %v307 = vmul.f32 %v302, %v305
    %309 = vrot.lane.b32.xlu0 %v284, 96
    %v310 = vpop.permute.xlu0 %309
    %v312 = vmul.f32 %v302, %v310
    %v314 = vsel %vm51, %v307, 0
    %316 = vmatprep.subr.mxu0 0.0
    %317 = vmatpush1.msra.mxu0 0.0
    %318 = vmatprep.subr.mxu0 0.0
    %319 = vmatpush1.msra.mxu0 0.0
    %320 = vmatprep.subr.mxu0 0.0
    %321 = vmatpush1.msra.mxu0 0.0
    %322 = vmatprep.subr.mxu0 0.0
    %323 = vmatpush1.msra.mxu0 0.0
    %324 = vmatprep.subr.mxu0 0.0
    %325 = vmatpush1.msra.mxu0 0.0
    %326 = vmatprep.subr.mxu0 0.0
    %327 = vmatpush1.msra.mxu0 0.0
    %328 = vmatprep.subr.mxu0 0.0
    %329 = vmatpush1.msra.mxu0 0.0
    %330 = vmatprep.subr.mxu0 0.0
    %331 = vmatpush1.msra.mxu0 0.0
    %332 = vmatprep.subr.mxu0 0.0
    %333 = vmatpush1.msra.mxu0 0.0
    %334 = vmatprep.subr.mxu0 0.0
    %335 = vmatpush1.msra.mxu0 0.0
    %336 = vmatprep.subr.mxu0 0.0
    %337 = vmatpush1.msra.mxu0 0.0
    %338 = vmatprep.subr.mxu0 0.0
    %339 = vmatpush1.msra.mxu0 0.0
    %340 = vmatprep.subr.mxu0 0.0
    %341 = vmatpush1.msra.mxu0 %v184
    %342 = vmatprep.subr.mxu0 0.0
    %343 = vmatpush1.msra.mxu0 %v183
    %344 = vmatprep.subr.mxu0 0.0
    %345 = vmatpush1.msra.mxu0 %v182
    %346 = vmatprep.subr.mxu0 0.0
    %347 = vmatpush1.msra.mxu0 %v181
    %348 = vmatprep.subr.mxu0 0.0
    %349 = vmatpush2.msra.mxu0 0.0
    %350 = vmatprep.subr.mxu0 0.0
    %351 = vmatpush2.msra.mxu0 0.0
    %352 = vmatprep.subr.mxu0 0.0
    %353 = vmatpush2.msra.mxu0 0.0
    %354 = vmatprep.subr.mxu0 0.0
    %355 = vmatpush2.msra.mxu0 0.0
    %356 = vmatprep.subr.mxu0 0.0
    %357 = vmatpush2.msra.mxu0 0.0
    %358 = vmatprep.subr.mxu0 0.0
    %359 = vmatpush2.msra.mxu0 0.0
    %360 = vmatprep.subr.mxu0 0.0
    %361 = vmatpush2.msra.mxu0 0.0
    %362 = vmatprep.subr.mxu0 0.0
    %363 = vmatpush2.msra.mxu0 0.0
    %364 = vmatprep.subr.mxu0 0.0
    %365 = vmatpush2.msra.mxu0 0.0
    %366 = vmatprep.subr.mxu0 0.0
    %367 = vmatpush2.msra.mxu0 0.0
    %368 = vmatprep.subr.mxu0 0.0
    %369 = vmatpush2.msra.mxu0 0.0
    %370 = vmatprep.subr.mxu0 0.0
    %371 = vmatpush2.msra.mxu0 0.0
    %372 = vmatprep.subr.mxu0 0.0
    %373 = vmatpush2.msra.mxu0 0.0
    %374 = vmatprep.subr.mxu0 0.0
    %375 = vmatpush2.msra.mxu0 0.0
    %376 = vmatprep.subr.mxu0 0.0
    %377 = vmatpush2.msra.mxu0 0.0
    %378 = vmatprep.subr.mxu0 0.0
    %379 = vmatpush2.msra.mxu0 0.0
    %380 = vmatprep.mubr.f32.mxu0 0.0
    %381 = vmatmul.mubr.f32.gmra.mxu0 %v314
    %v382 = vpop.f32.mrf.mxu0
    %v383 = vadd.f32 0.0, %v382
    %v384 = vpop.f32.mrf.mxu0
    %385 = vdwg.mxu0
    %v386 = vadd.f32 %v148, %v383
    %v387 = vmul.f32 %v386, %v190
    %v388 = vxor.u32 %v387, 2147483648
    %v389 = vmul.f32 %v388, 1.442695
    %v390 = vpow.pop %v389
    %v391 = vadd.f32 %v390, 1.0
    %v392 = vrcp.pop %v391
    %v393 = vmul.f32 1.0, %v392
    %v394 = vmul.f32 %v393, 2.0
    %v395 = vsub.f32 %v394, 1.0
    %397 = vrot.lane.b32.xlu0 %v312, 32
    %v398 = vpop.permute.xlu0 %397
    %v400 = vmul.f32 %v393, %v398
    %402 = vrot.lane.b32.xlu0 %v395, 64
    %v403 = vpop.permute.xlu0 %402
    %v405 = vmul.f32 %v393, %v403
    %407 = vrot.lane.b32.xlu0 %v405, 32
    %v408 = vpop.permute.xlu0 %407
    %v410 = vadd.f32 %v400, %v408
    %v411 = vtanh.pop %v410
    %413 = vrot.lane.b32.xlu0 %v411, 64
    %v414 = vpop.permute.xlu0 %413
    %v416 = vmul.f32 %v393, %v414
    %s417 = scalar_lea.vmem %s2, 8
    %v418 = vld [vmem:[%s417] sm:$0xff]
    %420 = vrot.lane.b32.xlu0 %v418, 96
    %v421 = vpop.permute.xlu0 %420
    %v423 = vmul.f32 %v416, %v421
    %v424 = vmax.f32 %v296, %v423
    %425 = vrot.lane.b32.xlu0 %v418, 32
    %v426 = vpop.permute.xlu0 %425
    %v428 = vmul.f32 %v410, %v426
    %v429 = vmax.f32 %v300, %v428
    %s430 = scalar_lea.vmem %s1, 128
    %v431 = vld [vmem:[%s430] sm:$0xff]
    %v432 = vmul.f32 %v431, %v305
    %s433 = scalar_lea.vmem %s1, 136
    %v434 = vld [vmem:[%s433] sm:$0xff]
    %436 = vrot.lane.b32.xlu0 %v416, 32
    %v437 = vpop.permute.xlu0 %436
    %v439 = vmul.f32 %v434, %v437
    %v440 = vadd.f32 %v432, %v439
    %v441 = vmul.f32 %v431, %v310
    %443 = vrot.lane.b32.xlu0 %v410, 96
    %v444 = vpop.permute.xlu0 %443
    %v446 = vmul.f32 %v434, %v444
    %v447 = vadd.f32 %v441, %v446
    %v449 = vsel %vm51, %v440, 0
    %451 = vmatprep.subr.mxu0 0.0
    %452 = vmatpush1.msra.mxu0 0.0
    %453 = vmatprep.subr.mxu0 0.0
    %454 = vmatpush1.msra.mxu0 0.0
    %455 = vmatprep.subr.mxu0 0.0
    %456 = vmatpush1.msra.mxu0 0.0
    %457 = vmatprep.subr.mxu0 0.0
    %458 = vmatpush1.msra.mxu0 0.0
    %459 = vmatprep.subr.mxu0 0.0
    %460 = vmatpush1.msra.mxu0 0.0
    %461 = vmatprep.subr.mxu0 0.0
    %462 = vmatpush1.msra.mxu0 0.0
    %463 = vmatprep.subr.mxu0 0.0
    %464 = vmatpush1.msra.mxu0 0.0
    %465 = vmatprep.subr.mxu0 0.0
    %466 = vmatpush1.msra.mxu0 0.0
    %467 = vmatprep.subr.mxu0 0.0
    %468 = vmatpush1.msra.mxu0 0.0
    %469 = vmatprep.subr.mxu0 0.0
    %470 = vmatpush1.msra.mxu0 0.0
    %471 = vmatprep.subr.mxu0 0.0
    %472 = vmatpush1.msra.mxu0 0.0
    %473 = vmatprep.subr.mxu0 0.0
    %474 = vmatpush1.msra.mxu0 0.0
    %475 = vmatprep.subr.mxu0 0.0
    %476 = vmatpush1.msra.mxu0 %v184
    %477 = vmatprep.subr.mxu0 0.0
    %478 = vmatpush1.msra.mxu0 %v183
    %479 = vmatprep.subr.mxu0 0.0
    %480 = vmatpush1.msra.mxu0 %v182
    %481 = vmatprep.subr.mxu0 0.0
    %482 = vmatpush1.msra.mxu0 %v181
    %483 = vmatprep.subr.mxu0 0.0
    %484 = vmatpush2.msra.mxu0 0.0
    %485 = vmatprep.subr.mxu0 0.0
    %486 = vmatpush2.msra.mxu0 0.0
    %487 = vmatprep.subr.mxu0 0.0
    %488 = vmatpush2.msra.mxu0 0.0
    %489 = vmatprep.subr.mxu0 0.0
    %490 = vmatpush2.msra.mxu0 0.0
    %491 = vmatprep.subr.mxu0 0.0
    %492 = vmatpush2.msra.mxu0 0.0
    %493 = vmatprep.subr.mxu0 0.0
    %494 = vmatpush2.msra.mxu0 0.0
    %495 = vmatprep.subr.mxu0 0.0
    %496 = vmatpush2.msra.mxu0 0.0
    %497 = vmatprep.subr.mxu0 0.0
    %498 = vmatpush2.msra.mxu0 0.0
    %499 = vmatprep.subr.mxu0 0.0
    %500 = vmatpush2.msra.mxu0 0.0
    %501 = vmatprep.subr.mxu0 0.0
    %502 = vmatpush2.msra.mxu0 0.0
    %503 = vmatprep.subr.mxu0 0.0
    %504 = vmatpush2.msra.mxu0 0.0
    %505 = vmatprep.subr.mxu0 0.0
    %506 = vmatpush2.msra.mxu0 0.0
    %507 = vmatprep.subr.mxu0 0.0
    %508 = vmatpush2.msra.mxu0 0.0
    %509 = vmatprep.subr.mxu0 0.0
    %510 = vmatpush2.msra.mxu0 0.0
    %511 = vmatprep.subr.mxu0 0.0
    %512 = vmatpush2.msra.mxu0 0.0
    %513 = vmatprep.subr.mxu0 0.0
    %514 = vmatpush2.msra.mxu0 0.0
    %515 = vmatprep.mubr.f32.mxu0 0.0
    %516 = vmatmul.mubr.f32.gmra.mxu0 %v449
    %v517 = vpop.f32.mrf.mxu0
    %v518 = vadd.f32 0.0, %v517
    %v519 = vpop.f32.mrf.mxu0
    %520 = vdwg.mxu0
    %v521 = vadd.f32 %v153, %v518
    %v522 = vmul.f32 %v521, %v190
    %v523 = vxor.u32 %v522, 2147483648
    %v524 = vmul.f32 %v523, 1.442695
    %v525 = vpow.pop %v524
    %v526 = vadd.f32 %v525, 1.0
    %v527 = vrcp.pop %v526
    %v528 = vmul.f32 1.0, %v527
    %v529 = vmul.f32 %v528, 2.0
    %v530 = vsub.f32 %v529, 1.0
    %532 = vrot.lane.b32.xlu0 %v447, 32
    %v533 = vpop.permute.xlu0 %532
    %v535 = vmul.f32 %v528, %v533
    %537 = vrot.lane.b32.xlu0 %v530, 64
    %v538 = vpop.permute.xlu0 %537
    %v540 = vmul.f32 %v528, %v538
    %542 = vrot.lane.b32.xlu0 %v540, 32
    %v543 = vpop.permute.xlu0 %542
    %v545 = vadd.f32 %v535, %v543
    %v546 = vtanh.pop %v545
    %548 = vrot.lane.b32.xlu0 %v546, 64
    %v549 = vpop.permute.xlu0 %548
    %v551 = vmul.f32 %v528, %v549
    %s552 = scalar_lea.vmem %s2, 16
    %v553 = vld [vmem:[%s552] sm:$0xff]
    %555 = vrot.lane.b32.xlu0 %v553, 96
    %v556 = vpop.permute.xlu0 %555
    %v558 = vmul.f32 %v551, %v556
    %v559 = vmax.f32 %v424, %v558
    %560 = vrot.lane.b32.xlu0 %v553, 32
    %v561 = vpop.permute.xlu0 %560
    %v563 = vmul.f32 %v545, %v561
    %v564 = vmax.f32 %v429, %v563
    %s565 = scalar_lea.vmem %s1, 192
    %v566 = vld [vmem:[%s565] sm:$0xff]
    %v567 = vmul.f32 %v566, %v305
    %s568 = scalar_lea.vmem %s1, 200
    %v569 = vld [vmem:[%s568] sm:$0xff]
    %v570 = vmul.f32 %v569, %v437
    %s571 = scalar_lea.vmem %s1, 208
    %v572 = vld [vmem:[%s571] sm:$0xff]
    %574 = vrot.lane.b32.xlu0 %v551, 32
    %v575 = vpop.permute.xlu0 %574
    %v577 = vmul.f32 %v572, %v575
    %v578 = vadd.f32 %v567, %v570
    %v579 = vadd.f32 %v578, %v577
    %v580 = vmul.f32 %v566, %v310
    %v581 = vmul.f32 %v569, %v444
    %583 = vrot.lane.b32.xlu0 %v545, 96
    %v584 = vpop.permute.xlu0 %583
    %v586 = vmul.f32 %v572, %v584
    %v587 = vadd.f32 %v580, %v581
    %v588 = vadd.f32 %v587, %v586
    %v590 = vsel %vm51, %v579, 0
    %592 = vmatprep.subr.mxu0 0.0
    %593 = vmatpush1.msra.mxu0 0.0
    %594 = vmatprep.subr.mxu0 0.0
    %595 = vmatpush1.msra.mxu0 0.0
    %596 = vmatprep.subr.mxu0 0.0
    %597 = vmatpush1.msra.mxu0 0.0
    %598 = vmatprep.subr.mxu0 0.0
    %599 = vmatpush1.msra.mxu0 0.0
    %600 = vmatprep.subr.mxu0 0.0
    %601 = vmatpush1.msra.mxu0 0.0
    %602 = vmatprep.subr.mxu0 0.0
    %603 = vmatpush1.msra.mxu0 0.0
    %604 = vmatprep.subr.mxu0 0.0
    %605 = vmatpush1.msra.mxu0 0.0
    %606 = vmatprep.subr.mxu0 0.0
    %607 = vmatpush1.msra.mxu0 0.0
    %608 = vmatprep.subr.mxu0 0.0
    %609 = vmatpush1.msra.mxu0 0.0
    %610 = vmatprep.subr.mxu0 0.0
    %611 = vmatpush1.msra.mxu0 0.0
    %612 = vmatprep.subr.mxu0 0.0
    %613 = vmatpush1.msra.mxu0 0.0
    %614 = vmatprep.subr.mxu0 0.0
    %615 = vmatpush1.msra.mxu0 0.0
    %616 = vmatprep.subr.mxu0 0.0
    %617 = vmatpush1.msra.mxu0 %v184
    %618 = vmatprep.subr.mxu0 0.0
    %619 = vmatpush1.msra.mxu0 %v183
    %620 = vmatprep.subr.mxu0 0.0
    %621 = vmatpush1.msra.mxu0 %v182
    %622 = vmatprep.subr.mxu0 0.0
    %623 = vmatpush1.msra.mxu0 %v181
    %624 = vmatprep.subr.mxu0 0.0
    %625 = vmatpush2.msra.mxu0 0.0
    %626 = vmatprep.subr.mxu0 0.0
    %627 = vmatpush2.msra.mxu0 0.0
    %628 = vmatprep.subr.mxu0 0.0
    %629 = vmatpush2.msra.mxu0 0.0
    %630 = vmatprep.subr.mxu0 0.0
    %631 = vmatpush2.msra.mxu0 0.0
    %632 = vmatprep.subr.mxu0 0.0
    %633 = vmatpush2.msra.mxu0 0.0
    %634 = vmatprep.subr.mxu0 0.0
    %635 = vmatpush2.msra.mxu0 0.0
    %636 = vmatprep.subr.mxu0 0.0
    %637 = vmatpush2.msra.mxu0 0.0
    %638 = vmatprep.subr.mxu0 0.0
    %639 = vmatpush2.msra.mxu0 0.0
    %640 = vmatprep.subr.mxu0 0.0
    %641 = vmatpush2.msra.mxu0 0.0
    %642 = vmatprep.subr.mxu0 0.0
    %643 = vmatpush2.msra.mxu0 0.0
    %644 = vmatprep.subr.mxu0 0.0
    %645 = vmatpush2.msra.mxu0 0.0
    %646 = vmatprep.subr.mxu0 0.0
    %647 = vmatpush2.msra.mxu0 0.0
    %648 = vmatprep.subr.mxu0 0.0
    %649 = vmatpush2.msra.mxu0 0.0
    %650 = vmatprep.subr.mxu0 0.0
    %651 = vmatpush2.msra.mxu0 0.0
    %652 = vmatprep.subr.mxu0 0.0
    %653 = vmatpush2.msra.mxu0 0.0
    %654 = vmatprep.subr.mxu0 0.0
    %655 = vmatpush2.msra.mxu0 0.0
    %656 = vmatprep.mubr.f32.mxu0 0.0
    %657 = vmatmul.mubr.f32.gmra.mxu0 %v590
    %v658 = vpop.f32.mrf.mxu0
    %v659 = vadd.f32 0.0, %v658
    %v660 = vpop.f32.mrf.mxu0
    %661 = vdwg.mxu0
    %v662 = vadd.f32 %v158, %v659
    %v663 = vmul.f32 %v662, %v190
    %v664 = vxor.u32 %v663, 2147483648
    %v665 = vmul.f32 %v664, 1.442695
    %v666 = vpow.pop %v665
    %v667 = vadd.f32 %v666, 1.0
    %v668 = vrcp.pop %v667
    %v669 = vmul.f32 1.0, %v668
    %v670 = vmul.f32 %v669, 2.0
    %v671 = vsub.f32 %v670, 1.0
    %673 = vrot.lane.b32.xlu0 %v588, 32
    %v674 = vpop.permute.xlu0 %673
    %v676 = vmul.f32 %v669, %v674
    %678 = vrot.lane.b32.xlu0 %v671, 64
    %v679 = vpop.permute.xlu0 %678
    %v681 = vmul.f32 %v669, %v679
    %683 = vrot.lane.b32.xlu0 %v681, 32
    %v684 = vpop.permute.xlu0 %683
    %v686 = vadd.f32 %v676, %v684
    %v687 = vtanh.pop %v686
    %689 = vrot.lane.b32.xlu0 %v687, 64
    %v690 = vpop.permute.xlu0 %689
    %v692 = vmul.f32 %v669, %v690
    %s693 = scalar_lea.vmem %s2, 24
    %v694 = vld [vmem:[%s693] sm:$0xff]
    %696 = vrot.lane.b32.xlu0 %v694, 96
    %v697 = vpop.permute.xlu0 %696
    %v699 = vmul.f32 %v692, %v697
    %v700 = vmax.f32 %v559, %v699
    %701 = vrot.lane.b32.xlu0 %v694, 32
    %v702 = vpop.permute.xlu0 %701
    %v704 = vmul.f32 %v686, %v702
    %v705 = vmax.f32 %v564, %v704
    %s706 = scalar_lea.vmem %s1, 256
    %v707 = vld [vmem:[%s706] sm:$0xff]
    %v708 = vmul.f32 %v707, %v305
    %s709 = scalar_lea.vmem %s1, 264
    %v710 = vld [vmem:[%s709] sm:$0xff]
    %v711 = vmul.f32 %v710, %v437
    %s712 = scalar_lea.vmem %s1, 272
    %v713 = vld [vmem:[%s712] sm:$0xff]
    %v714 = vmul.f32 %v713, %v575
    %s715 = scalar_lea.vmem %s1, 280
    %v716 = vld [vmem:[%s715] sm:$0xff]
    %718 = vrot.lane.b32.xlu0 %v692, 32
    %v719 = vpop.permute.xlu0 %718
    %v721 = vmul.f32 %v716, %v719
    %v722 = vadd.f32 %v708, %v711
    %v723 = vadd.f32 %v714, %v721
    %v724 = vadd.f32 %v722, %v723
    %v725 = vmul.f32 %v707, %v310
    %v726 = vmul.f32 %v710, %v444
    %v727 = vmul.f32 %v713, %v584
    %729 = vrot.lane.b32.xlu0 %v686, 96
    %v730 = vpop.permute.xlu0 %729
    %v732 = vmul.f32 %v716, %v730
    %v733 = vadd.f32 %v725, %v726
    %v734 = vadd.f32 %v727, %v732
    %v735 = vadd.f32 %v733, %v734
    %v737 = vsel %vm51, %v724, 0
    %739 = vmatprep.subr.mxu0 0.0
    %740 = vmatpush1.msra.mxu0 0.0
    %741 = vmatprep.subr.mxu0 0.0
    %742 = vmatpush1.msra.mxu0 0.0
    %743 = vmatprep.subr.mxu0 0.0
    %744 = vmatpush1.msra.mxu0 0.0
    %745 = vmatprep.subr.mxu0 0.0
    %746 = vmatpush1.msra.mxu0 0.0
    %747 = vmatprep.subr.mxu0 0.0
    %748 = vmatpush1.msra.mxu0 0.0
    %749 = vmatprep.subr.mxu0 0.0
    %750 = vmatpush1.msra.mxu0 0.0
    %751 = vmatprep.subr.mxu0 0.0
    %752 = vmatpush1.msra.mxu0 0.0
    %753 = vmatprep.subr.mxu0 0.0
    %754 = vmatpush1.msra.mxu0 0.0
    %755 = vmatprep.subr.mxu0 0.0
    %756 = vmatpush1.msra.mxu0 0.0
    %757 = vmatprep.subr.mxu0 0.0
    %758 = vmatpush1.msra.mxu0 0.0
    %759 = vmatprep.subr.mxu0 0.0
    %760 = vmatpush1.msra.mxu0 0.0
    %761 = vmatprep.subr.mxu0 0.0
    %762 = vmatpush1.msra.mxu0 0.0
    %763 = vmatprep.subr.mxu0 0.0
    %764 = vmatpush1.msra.mxu0 %v184
    %765 = vmatprep.subr.mxu0 0.0
    %766 = vmatpush1.msra.mxu0 %v183
    %767 = vmatprep.subr.mxu0 0.0
    %768 = vmatpush1.msra.mxu0 %v182
    %769 = vmatprep.subr.mxu0 0.0
    %770 = vmatpush1.msra.mxu0 %v181
    %771 = vmatprep.subr.mxu0 0.0
    %772 = vmatpush2.msra.mxu0 0.0
    %773 = vmatprep.subr.mxu0 0.0
    %774 = vmatpush2.msra.mxu0 0.0
    %775 = vmatprep.subr.mxu0 0.0
    %776 = vmatpush2.msra.mxu0 0.0
    %777 = vmatprep.subr.mxu0 0.0
    %778 = vmatpush2.msra.mxu0 0.0
    %779 = vmatprep.subr.mxu0 0.0
    %780 = vmatpush2.msra.mxu0 0.0
    %781 = vmatprep.subr.mxu0 0.0
    %782 = vmatpush2.msra.mxu0 0.0
    %783 = vmatprep.subr.mxu0 0.0
    %784 = vmatpush2.msra.mxu0 0.0
    %785 = vmatprep.subr.mxu0 0.0
    %786 = vmatpush2.msra.mxu0 0.0
    %787 = vmatprep.subr.mxu0 0.0
    %788 = vmatpush2.msra.mxu0 0.0
    %789 = vmatprep.subr.mxu0 0.0
    %790 = vmatpush2.msra.mxu0 0.0
    %791 = vmatprep.subr.mxu0 0.0
    %792 = vmatpush2.msra.mxu0 0.0
    %793 = vmatprep.subr.mxu0 0.0
    %794 = vmatpush2.msra.mxu0 0.0
    %795 = vmatprep.subr.mxu0 0.0
    %796 = vmatpush2.msra.mxu0 0.0
    %797 = vmatprep.subr.mxu0 0.0
    %798 = vmatpush2.msra.mxu0 0.0
    %799 = vmatprep.subr.mxu0 0.0
    %800 = vmatpush2.msra.mxu0 0.0
    %801 = vmatprep.subr.mxu0 0.0
    %802 = vmatpush2.msra.mxu0 0.0
    %803 = vmatprep.mubr.f32.mxu0 0.0
    %804 = vmatmul.mubr.f32.gmra.mxu0 %v737
    %v805 = vpop.f32.mrf.mxu0
    %v806 = vadd.f32 0.0, %v805
    %v807 = vpop.f32.mrf.mxu0
    %808 = vdwg.mxu0
    %v809 = vadd.f32 %v163, %v806
    %v810 = vmul.f32 %v809, %v190
    %v811 = vxor.u32 %v810, 2147483648
    %v812 = vmul.f32 %v811, 1.442695
    %v813 = vpow.pop %v812
    %v814 = vadd.f32 %v813, 1.0
    %v815 = vrcp.pop %v814
    %v816 = vmul.f32 1.0, %v815
    %v817 = vmul.f32 %v816, 2.0
    %v818 = vsub.f32 %v817, 1.0
    %820 = vrot.lane.b32.xlu0 %v735, 32
    %v821 = vpop.permute.xlu0 %820
    %v823 = vmul.f32 %v816, %v821
    %825 = vrot.lane.b32.xlu0 %v818, 64
    %v826 = vpop.permute.xlu0 %825
    %v828 = vmul.f32 %v816, %v826
    %830 = vrot.lane.b32.xlu0 %v828, 32
    %v831 = vpop.permute.xlu0 %830
    %v833 = vadd.f32 %v823, %v831
    %v834 = vtanh.pop %v833
    %836 = vrot.lane.b32.xlu0 %v834, 64
    %v837 = vpop.permute.xlu0 %836
    %v839 = vmul.f32 %v816, %v837
    %s840 = scalar_lea.vmem %s2, 32
    %v841 = vld [vmem:[%s840] sm:$0xff]
    %843 = vrot.lane.b32.xlu0 %v841, 96
    %v844 = vpop.permute.xlu0 %843
    %v846 = vmul.f32 %v839, %v844
    %v847 = vmax.f32 %v700, %v846
    %848 = vrot.lane.b32.xlu0 %v841, 32
    %v849 = vpop.permute.xlu0 %848
    %v851 = vmul.f32 %v833, %v849
    %v852 = vmax.f32 %v705, %v851
    %s853 = scalar_lea.vmem %s1, 320
    %v854 = vld [vmem:[%s853] sm:$0xff]
    %v855 = vmul.f32 %v854, %v305
    %s856 = scalar_lea.vmem %s1, 328
    %v857 = vld [vmem:[%s856] sm:$0xff]
    %v858 = vmul.f32 %v857, %v437
    %s859 = scalar_lea.vmem %s1, 336
    %v860 = vld [vmem:[%s859] sm:$0xff]
    %v861 = vmul.f32 %v860, %v575
    %s862 = scalar_lea.vmem %s1, 344
    %v863 = vld [vmem:[%s862] sm:$0xff]
    %v864 = vmul.f32 %v863, %v719
    %s865 = scalar_lea.vmem %s1, 352
    %v866 = vld [vmem:[%s865] sm:$0xff]
    %868 = vrot.lane.b32.xlu0 %v839, 32
    %v869 = vpop.permute.xlu0 %868
    %v871 = vmul.f32 %v866, %v869
    %v872 = vadd.f32 %v855, %v858
    %v873 = vadd.f32 %v861, %v864
    %v874 = vadd.f32 %v872, %v873
    %v875 = vadd.f32 %v874, %v871
    %v876 = vmul.f32 %v854, %v310
    %v877 = vmul.f32 %v857, %v444
    %v878 = vmul.f32 %v860, %v584
    %v879 = vmul.f32 %v863, %v730
    %881 = vrot.lane.b32.xlu0 %v833, 96
    %v882 = vpop.permute.xlu0 %881
    %v884 = vmul.f32 %v866, %v882
    %v885 = vadd.f32 %v876, %v877
    %v886 = vadd.f32 %v878, %v879
    %v887 = vadd.f32 %v885, %v886
    %v888 = vadd.f32 %v887, %v884
    %v890 = vsel %vm51, %v875, 0
    %892 = vmatprep.subr.mxu0 0.0
    %893 = vmatpush1.msra.mxu0 0.0
    %894 = vmatprep.subr.mxu0 0.0
    %895 = vmatpush1.msra.mxu0 0.0
    %896 = vmatprep.subr.mxu0 0.0
    %897 = vmatpush1.msra.mxu0 0.0
    %898 = vmatprep.subr.mxu0 0.0
    %899 = vmatpush1.msra.mxu0 0.0
    %900 = vmatprep.subr.mxu0 0.0
    %901 = vmatpush1.msra.mxu0 0.0
    %902 = vmatprep.subr.mxu0 0.0
    %903 = vmatpush1.msra.mxu0 0.0
    %904 = vmatprep.subr.mxu0 0.0
    %905 = vmatpush1.msra.mxu0 0.0
    %906 = vmatprep.subr.mxu0 0.0
    %907 = vmatpush1.msra.mxu0 0.0
    %908 = vmatprep.subr.mxu0 0.0
    %909 = vmatpush1.msra.mxu0 0.0
    %910 = vmatprep.subr.mxu0 0.0
    %911 = vmatpush1.msra.mxu0 0.0
    %912 = vmatprep.subr.mxu0 0.0
    %913 = vmatpush1.msra.mxu0 0.0
    %914 = vmatprep.subr.mxu0 0.0
    %915 = vmatpush1.msra.mxu0 0.0
    %916 = vmatprep.subr.mxu0 0.0
    %917 = vmatpush1.msra.mxu0 %v184
    %918 = vmatprep.subr.mxu0 0.0
    %919 = vmatpush1.msra.mxu0 %v183
    %920 = vmatprep.subr.mxu0 0.0
    %921 = vmatpush1.msra.mxu0 %v182
    %922 = vmatprep.subr.mxu0 0.0
    %923 = vmatpush1.msra.mxu0 %v181
    %924 = vmatprep.subr.mxu0 0.0
    %925 = vmatpush2.msra.mxu0 0.0
    %926 = vmatprep.subr.mxu0 0.0
    %927 = vmatpush2.msra.mxu0 0.0
    %928 = vmatprep.subr.mxu0 0.0
    %929 = vmatpush2.msra.mxu0 0.0
    %930 = vmatprep.subr.mxu0 0.0
    %931 = vmatpush2.msra.mxu0 0.0
    %932 = vmatprep.subr.mxu0 0.0
    %933 = vmatpush2.msra.mxu0 0.0
    %934 = vmatprep.subr.mxu0 0.0
    %935 = vmatpush2.msra.mxu0 0.0
    %936 = vmatprep.subr.mxu0 0.0
    %937 = vmatpush2.msra.mxu0 0.0
    %938 = vmatprep.subr.mxu0 0.0
    %939 = vmatpush2.msra.mxu0 0.0
    %940 = vmatprep.subr.mxu0 0.0
    %941 = vmatpush2.msra.mxu0 0.0
    %942 = vmatprep.subr.mxu0 0.0
    %943 = vmatpush2.msra.mxu0 0.0
    %944 = vmatprep.subr.mxu0 0.0
    %945 = vmatpush2.msra.mxu0 0.0
    %946 = vmatprep.subr.mxu0 0.0
    %947 = vmatpush2.msra.mxu0 0.0
    %948 = vmatprep.subr.mxu0 0.0
    %949 = vmatpush2.msra.mxu0 0.0
    %950 = vmatprep.subr.mxu0 0.0
    %951 = vmatpush2.msra.mxu0 0.0
    %952 = vmatprep.subr.mxu0 0.0
    %953 = vmatpush2.msra.mxu0 0.0
    %954 = vmatprep.subr.mxu0 0.0
    %955 = vmatpush2.msra.mxu0 0.0
    %956 = vmatprep.mubr.f32.mxu0 0.0
    %957 = vmatmul.mubr.f32.gmra.mxu0 %v890
    %v958 = vpop.f32.mrf.mxu0
    %v959 = vadd.f32 0.0, %v958
    %v960 = vpop.f32.mrf.mxu0
    %961 = vdwg.mxu0
    %v962 = vadd.f32 %v168, %v959
    %v963 = vmul.f32 %v962, %v190
    %v964 = vxor.u32 %v963, 2147483648
    %v965 = vmul.f32 %v964, 1.442695
    %v966 = vpow.pop %v965
    %v967 = vadd.f32 %v966, 1.0
    %v968 = vrcp.pop %v967
    %v969 = vmul.f32 1.0, %v968
    %v970 = vmul.f32 %v969, 2.0
    %v971 = vsub.f32 %v970, 1.0
    %973 = vrot.lane.b32.xlu0 %v888, 32
    %v974 = vpop.permute.xlu0 %973
    %v976 = vmul.f32 %v969, %v974
    %978 = vrot.lane.b32.xlu0 %v971, 64
    %v979 = vpop.permute.xlu0 %978
    %v981 = vmul.f32 %v969, %v979
    %983 = vrot.lane.b32.xlu0 %v981, 32
    %v984 = vpop.permute.xlu0 %983
    %v986 = vadd.f32 %v976, %v984
    %v987 = vtanh.pop %v986
    %989 = vrot.lane.b32.xlu0 %v987, 64
    %v990 = vpop.permute.xlu0 %989
    %v992 = vmul.f32 %v969, %v990
    %s993 = scalar_lea.vmem %s2, 40
    %v994 = vld [vmem:[%s993] sm:$0xff]
    %996 = vrot.lane.b32.xlu0 %v994, 96
    %v997 = vpop.permute.xlu0 %996
    %v999 = vmul.f32 %v992, %v997
    %v1000 = vmax.f32 %v847, %v999
    %1001 = vrot.lane.b32.xlu0 %v994, 32
    %v1002 = vpop.permute.xlu0 %1001
    %v1004 = vmul.f32 %v986, %v1002
    %v1005 = vmax.f32 %v852, %v1004
    %s1006 = scalar_lea.vmem %s1, 384
    %v1007 = vld [vmem:[%s1006] sm:$0xff]
    %v1008 = vmul.f32 %v1007, %v305
    %s1009 = scalar_lea.vmem %s1, 392
    %v1010 = vld [vmem:[%s1009] sm:$0xff]
    %v1011 = vmul.f32 %v1010, %v437
    %s1012 = scalar_lea.vmem %s1, 400
    %v1013 = vld [vmem:[%s1012] sm:$0xff]
    %v1014 = vmul.f32 %v1013, %v575
    %s1015 = scalar_lea.vmem %s1, 408
    %v1016 = vld [vmem:[%s1015] sm:$0xff]
    %v1017 = vmul.f32 %v1016, %v719
    %s1018 = scalar_lea.vmem %s1, 416
    %v1019 = vld [vmem:[%s1018] sm:$0xff]
    %v1020 = vmul.f32 %v1019, %v869
    %s1021 = scalar_lea.vmem %s1, 424
    %v1022 = vld [vmem:[%s1021] sm:$0xff]
    %1024 = vrot.lane.b32.xlu0 %v992, 32
    %v1025 = vpop.permute.xlu0 %1024
    %v1027 = vmul.f32 %v1022, %v1025
    %v1028 = vadd.f32 %v1008, %v1011
    %v1029 = vadd.f32 %v1014, %v1017
    %v1030 = vadd.f32 %v1020, %v1027
    %v1031 = vadd.f32 %v1028, %v1029
    %v1032 = vadd.f32 %v1031, %v1030
    %v1033 = vmul.f32 %v1007, %v310
    %v1034 = vmul.f32 %v1010, %v444
    %v1035 = vmul.f32 %v1013, %v584
    %v1036 = vmul.f32 %v1016, %v730
    %v1037 = vmul.f32 %v1019, %v882
    %1039 = vrot.lane.b32.xlu0 %v986, 96
    %v1040 = vpop.permute.xlu0 %1039
    %v1042 = vmul.f32 %v1022, %v1040
    %v1043 = vadd.f32 %v1033, %v1034
    %v1044 = vadd.f32 %v1035, %v1036
    %v1045 = vadd.f32 %v1037, %v1042
    %v1046 = vadd.f32 %v1043, %v1044
    %v1047 = vadd.f32 %v1046, %v1045
    %v1049 = vsel %vm51, %v1032, 0
    %1051 = vmatprep.subr.mxu0 0.0
    %1052 = vmatpush1.msra.mxu0 0.0
    %1053 = vmatprep.subr.mxu0 0.0
    %1054 = vmatpush1.msra.mxu0 0.0
    %1055 = vmatprep.subr.mxu0 0.0
    %1056 = vmatpush1.msra.mxu0 0.0
    %1057 = vmatprep.subr.mxu0 0.0
    %1058 = vmatpush1.msra.mxu0 0.0
    %1059 = vmatprep.subr.mxu0 0.0
    %1060 = vmatpush1.msra.mxu0 0.0
    %1061 = vmatprep.subr.mxu0 0.0
    %1062 = vmatpush1.msra.mxu0 0.0
    %1063 = vmatprep.subr.mxu0 0.0
    %1064 = vmatpush1.msra.mxu0 0.0
    %1065 = vmatprep.subr.mxu0 0.0
    %1066 = vmatpush1.msra.mxu0 0.0
    %1067 = vmatprep.subr.mxu0 0.0
    %1068 = vmatpush1.msra.mxu0 0.0
    %1069 = vmatprep.subr.mxu0 0.0
    %1070 = vmatpush1.msra.mxu0 0.0
    %1071 = vmatprep.subr.mxu0 0.0
    %1072 = vmatpush1.msra.mxu0 0.0
    %1073 = vmatprep.subr.mxu0 0.0
    %1074 = vmatpush1.msra.mxu0 0.0
    %1075 = vmatprep.subr.mxu0 0.0
    %1076 = vmatpush1.msra.mxu0 %v184
    %1077 = vmatprep.subr.mxu0 0.0
    %1078 = vmatpush1.msra.mxu0 %v183
    %1079 = vmatprep.subr.mxu0 0.0
    %1080 = vmatpush1.msra.mxu0 %v182
    %1081 = vmatprep.subr.mxu0 0.0
    %1082 = vmatpush1.msra.mxu0 %v181
    %1083 = vmatprep.subr.mxu0 0.0
    %1084 = vmatpush2.msra.mxu0 0.0
    %1085 = vmatprep.subr.mxu0 0.0
    %1086 = vmatpush2.msra.mxu0 0.0
    %1087 = vmatprep.subr.mxu0 0.0
    %1088 = vmatpush2.msra.mxu0 0.0
    %1089 = vmatprep.subr.mxu0 0.0
    %1090 = vmatpush2.msra.mxu0 0.0
    %1091 = vmatprep.subr.mxu0 0.0
    %1092 = vmatpush2.msra.mxu0 0.0
    %1093 = vmatprep.subr.mxu0 0.0
    %1094 = vmatpush2.msra.mxu0 0.0
    %1095 = vmatprep.subr.mxu0 0.0
    %1096 = vmatpush2.msra.mxu0 0.0
    %1097 = vmatprep.subr.mxu0 0.0
    %1098 = vmatpush2.msra.mxu0 0.0
    %1099 = vmatprep.subr.mxu0 0.0
    %1100 = vmatpush2.msra.mxu0 0.0
    %1101 = vmatprep.subr.mxu0 0.0
    %1102 = vmatpush2.msra.mxu0 0.0
    %1103 = vmatprep.subr.mxu0 0.0
    %1104 = vmatpush2.msra.mxu0 0.0
    %1105 = vmatprep.subr.mxu0 0.0
    %1106 = vmatpush2.msra.mxu0 0.0
    %1107 = vmatprep.subr.mxu0 0.0
    %1108 = vmatpush2.msra.mxu0 0.0
    %1109 = vmatprep.subr.mxu0 0.0
    %1110 = vmatpush2.msra.mxu0 0.0
    %1111 = vmatprep.subr.mxu0 0.0
    %1112 = vmatpush2.msra.mxu0 0.0
    %1113 = vmatprep.subr.mxu0 0.0
    %1114 = vmatpush2.msra.mxu0 0.0
    %1115 = vmatprep.mubr.f32.mxu0 0.0
    %1116 = vmatmul.mubr.f32.gmra.mxu0 %v1049
    %v1117 = vpop.f32.mrf.mxu0
    %v1118 = vadd.f32 0.0, %v1117
    %v1119 = vpop.f32.mrf.mxu0
    %1120 = vdwg.mxu0
    %v1121 = vadd.f32 %v173, %v1118
    %v1122 = vmul.f32 %v1121, %v190
    %v1123 = vxor.u32 %v1122, 2147483648
    %v1124 = vmul.f32 %v1123, 1.442695
    %v1125 = vpow.pop %v1124
    %v1126 = vadd.f32 %v1125, 1.0
    %v1127 = vrcp.pop %v1126
    %v1128 = vmul.f32 1.0, %v1127
    %v1129 = vmul.f32 %v1128, 2.0
    %v1130 = vsub.f32 %v1129, 1.0
    %1132 = vrot.lane.b32.xlu0 %v1047, 32
    %v1133 = vpop.permute.xlu0 %1132
    %v1135 = vmul.f32 %v1128, %v1133
    %1137 = vrot.lane.b32.xlu0 %v1130, 64
    %v1138 = vpop.permute.xlu0 %1137
    %v1140 = vmul.f32 %v1128, %v1138
    %1142 = vrot.lane.b32.xlu0 %v1140, 32
    %v1143 = vpop.permute.xlu0 %1142
    %v1145 = vadd.f32 %v1135, %v1143
    %v1146 = vtanh.pop %v1145
    %1148 = vrot.lane.b32.xlu0 %v1146, 64
    %v1149 = vpop.permute.xlu0 %1148
    %v1151 = vmul.f32 %v1128, %v1149
    %s1152 = scalar_lea.vmem %s2, 48
    %v1153 = vld [vmem:[%s1152] sm:$0xff]
    %1155 = vrot.lane.b32.xlu0 %v1153, 96
    %v1156 = vpop.permute.xlu0 %1155
    %v1158 = vmul.f32 %v1151, %v1156
    %v1159 = vmax.f32 %v1000, %v1158
    %1160 = vrot.lane.b32.xlu0 %v1153, 32
    %v1161 = vpop.permute.xlu0 %1160
    %v1163 = vmul.f32 %v1145, %v1161
    %v1164 = vmax.f32 %v1005, %v1163
    %s1165 = scalar_lea.vmem %s1, 448
    %v1166 = vld [vmem:[%s1165] sm:$0xff]
    %v1167 = vmul.f32 %v1166, %v305
    %s1168 = scalar_lea.vmem %s1, 456
    %v1169 = vld [vmem:[%s1168] sm:$0xff]
    %v1170 = vmul.f32 %v1169, %v437
    %s1171 = scalar_lea.vmem %s1, 464
    %v1172 = vld [vmem:[%s1171] sm:$0xff]
    %v1173 = vmul.f32 %v1172, %v575
    %s1174 = scalar_lea.vmem %s1, 472
    %v1175 = vld [vmem:[%s1174] sm:$0xff]
    %v1176 = vmul.f32 %v1175, %v719
    %s1177 = scalar_lea.vmem %s1, 480
    %v1178 = vld [vmem:[%s1177] sm:$0xff]
    %v1179 = vmul.f32 %v1178, %v869
    %s1180 = scalar_lea.vmem %s1, 488
    %v1181 = vld [vmem:[%s1180] sm:$0xff]
    %v1182 = vmul.f32 %v1181, %v1025
    %s1183 = scalar_lea.vmem %s1, 496
    %v1184 = vld [vmem:[%s1183] sm:$0xff]
    %1186 = vrot.lane.b32.xlu0 %v1151, 32
    %v1187 = vpop.permute.xlu0 %1186
    %v1189 = vmul.f32 %v1184, %v1187
    %v1190 = vadd.f32 %v1167, %v1170
    %v1191 = vadd.f32 %v1173, %v1176
    %v1192 = vadd.f32 %v1179, %v1182
    %v1193 = vadd.f32 %v1190, %v1191
    %v1194 = vadd.f32 %v1192, %v1189
    %v1195 = vadd.f32 %v1193, %v1194
    %v1196 = vmul.f32 %v1166, %v310
    %v1197 = vmul.f32 %v1169, %v444
    %v1198 = vmul.f32 %v1172, %v584
    %v1199 = vmul.f32 %v1175, %v730
    %v1200 = vmul.f32 %v1178, %v882
    %v1201 = vmul.f32 %v1181, %v1040
    %1203 = vrot.lane.b32.xlu0 %v1145, 96
    %v1204 = vpop.permute.xlu0 %1203
    %v1206 = vmul.f32 %v1184, %v1204
    %v1207 = vadd.f32 %v1196, %v1197
    %v1208 = vadd.f32 %v1198, %v1199
    %v1209 = vadd.f32 %v1200, %v1201
    %v1210 = vadd.f32 %v1207, %v1208
    %v1211 = vadd.f32 %v1209, %v1206
    %v1212 = vadd.f32 %v1210, %v1211
    %v1214 = vsel %vm51, %v1195, 0
    %1216 = vmatprep.subr.mxu0 0.0
    %1217 = vmatpush1.msra.mxu0 0.0
    %1218 = vmatprep.subr.mxu0 0.0
    %1219 = vmatpush1.msra.mxu0 0.0
    %1220 = vmatprep.subr.mxu0 0.0
    %1221 = vmatpush1.msra.mxu0 0.0
    %1222 = vmatprep.subr.mxu0 0.0
    %1223 = vmatpush1.msra.mxu0 0.0
    %1224 = vmatprep.subr.mxu0 0.0
    %1225 = vmatpush1.msra.mxu0 0.0
    %1226 = vmatprep.subr.mxu0 0.0
    %1227 = vmatpush1.msra.mxu0 0.0
    %1228 = vmatprep.subr.mxu0 0.0
    %1229 = vmatpush1.msra.mxu0 0.0
    %1230 = vmatprep.subr.mxu0 0.0
    %1231 = vmatpush1.msra.mxu0 0.0
    %1232 = vmatprep.subr.mxu0 0.0
    %1233 = vmatpush1.msra.mxu0 0.0
    %1234 = vmatprep.subr.mxu0 0.0
    %1235 = vmatpush1.msra.mxu0 0.0
    %1236 = vmatprep.subr.mxu0 0.0
    %1237 = vmatpush1.msra.mxu0 0.0
    %1238 = vmatprep.subr.mxu0 0.0
    %1239 = vmatpush1.msra.mxu0 0.0
    %1240 = vmatprep.subr.mxu0 0.0
    %1241 = vmatpush1.msra.mxu0 %v184
    %1242 = vmatprep.subr.mxu0 0.0
    %1243 = vmatpush1.msra.mxu0 %v183
    %1244 = vmatprep.subr.mxu0 0.0
    %1245 = vmatpush1.msra.mxu0 %v182
    %1246 = vmatprep.subr.mxu0 0.0
    %1247 = vmatpush1.msra.mxu0 %v181
    %1248 = vmatprep.subr.mxu0 0.0
    %1249 = vmatpush2.msra.mxu0 0.0
    %1250 = vmatprep.subr.mxu0 0.0
    %1251 = vmatpush2.msra.mxu0 0.0
    %1252 = vmatprep.subr.mxu0 0.0
    %1253 = vmatpush2.msra.mxu0 0.0
    %1254 = vmatprep.subr.mxu0 0.0
    %1255 = vmatpush2.msra.mxu0 0.0
    %1256 = vmatprep.subr.mxu0 0.0
    %1257 = vmatpush2.msra.mxu0 0.0
    %1258 = vmatprep.subr.mxu0 0.0
    %1259 = vmatpush2.msra.mxu0 0.0
    %1260 = vmatprep.subr.mxu0 0.0
    %1261 = vmatpush2.msra.mxu0 0.0
    %1262 = vmatprep.subr.mxu0 0.0
    %1263 = vmatpush2.msra.mxu0 0.0
    %1264 = vmatprep.subr.mxu0 0.0
    %1265 = vmatpush2.msra.mxu0 0.0
    %1266 = vmatprep.subr.mxu0 0.0
    %1267 = vmatpush2.msra.mxu0 0.0
    %1268 = vmatprep.subr.mxu0 0.0
    %1269 = vmatpush2.msra.mxu0 0.0
    %1270 = vmatprep.subr.mxu0 0.0
    %1271 = vmatpush2.msra.mxu0 0.0
    %1272 = vmatprep.subr.mxu0 0.0
    %1273 = vmatpush2.msra.mxu0 0.0
    %1274 = vmatprep.subr.mxu0 0.0
    %1275 = vmatpush2.msra.mxu0 0.0
    %1276 = vmatprep.subr.mxu0 0.0
    %1277 = vmatpush2.msra.mxu0 0.0
    %1278 = vmatprep.subr.mxu0 0.0
    %1279 = vmatpush2.msra.mxu0 0.0
    %1280 = vmatprep.mubr.f32.mxu0 0.0
    %1281 = vmatmul.mubr.f32.gmra.mxu0 %v1214
    %v1282 = vpop.f32.mrf.mxu0
    %v1283 = vadd.f32 0.0, %v1282
    %v1284 = vpop.f32.mrf.mxu0
    %1285 = vdwg.mxu0
    %v1286 = vadd.f32 %v178, %v1283
    %v1287 = vmul.f32 %v1286, %v190
    %v1288 = vxor.u32 %v1287, 2147483648
    %v1289 = vmul.f32 %v1288, 1.442695
    %v1290 = vpow.pop %v1289
    %v1291 = vadd.f32 %v1290, 1.0
    %v1292 = vrcp.pop %v1291
    %v1293 = vmul.f32 1.0, %v1292
    %v1294 = vmul.f32 %v1293, 2.0
    %v1295 = vsub.f32 %v1294, 1.0
    %1297 = vrot.lane.b32.xlu0 %v1212, 32
    %v1298 = vpop.permute.xlu0 %1297
    %v1300 = vmul.f32 %v1293, %v1298
    %1302 = vrot.lane.b32.xlu0 %v1295, 64
    %v1303 = vpop.permute.xlu0 %1302
    %v1305 = vmul.f32 %v1293, %v1303
    %1307 = vrot.lane.b32.xlu0 %v1305, 32
    %v1308 = vpop.permute.xlu0 %1307
    %v1310 = vadd.f32 %v1300, %v1308
    %v1311 = vtanh.pop %v1310
    %1313 = vrot.lane.b32.xlu0 %v1311, 64
    %v1314 = vpop.permute.xlu0 %1313
    %v1316 = vmul.f32 %v1293, %v1314
    %s1317 = scalar_lea.vmem %s2, 56
    %v1318 = vld [vmem:[%s1317] sm:$0xff]
    %1320 = vrot.lane.b32.xlu0 %v1318, 96
    %v1321 = vpop.permute.xlu0 %1320
    %v1323 = vmul.f32 %v1316, %v1321
    %v1324 = vmax.f32 %v1159, %v1323
    %1325 = vrot.lane.b32.xlu0 %v1318, 32
    %v1326 = vpop.permute.xlu0 %1325
    %v1328 = vmul.f32 %v1310, %v1326
    %v1329 = vmax.f32 %v1164, %v1328
    %1338 = vrot.lane.b32.xlu0 %v296, 32
    %v1339 = vpop.permute.xlu0 %1338
    %1340 = vrot.lane.b32.xlu0 %v423, 32
    %v1341 = vpop.permute.xlu0 %1340
    %1342 = vrot.lane.b32.xlu0 %v558, 32
    %v1343 = vpop.permute.xlu0 %1342
    %1344 = vrot.lane.b32.xlu0 %v699, 32
    %v1345 = vpop.permute.xlu0 %1344
    %1346 = vrot.lane.b32.xlu0 %v846, 32
    %v1347 = vpop.permute.xlu0 %1346
    %1348 = vrot.lane.b32.xlu0 %v999, 32
    %v1349 = vpop.permute.xlu0 %1348
    %1350 = vrot.lane.b32.xlu0 %v1158, 32
    %v1351 = vpop.permute.xlu0 %1350
    %1352 = vrot.lane.b32.xlu0 %v1323, 32
    %v1353 = vpop.permute.xlu0 %1352
    %1362 = vst.msk [vmem:[%s7] sm:$0xff] %vm51, %v1339
    %1363 = vst.msk [vmem:[%s7 + $0x8] sm:$0xff] %vm51, %v1341
    %1364 = vst.msk [vmem:[%s7 + $0x10] sm:$0xff] %vm51, %v1343
    %1365 = vst.msk [vmem:[%s7 + $0x18] sm:$0xff] %vm51, %v1345
    %1366 = vst.msk [vmem:[%s7 + $0x20] sm:$0xff] %vm51, %v1347
    %1367 = vst.msk [vmem:[%s7 + $0x28] sm:$0xff] %vm51, %v1349
    %1368 = vst.msk [vmem:[%s7 + $0x30] sm:$0xff] %vm51, %v1351
    %1369 = vst.msk [vmem:[%s7 + $0x38] sm:$0xff] %vm51, %v1353
    %v1370 = vld [vmem:[%s6] sm:$0xff]
    %v1371 = vld [vmem:[%s6 + $0x8] sm:$0xff]
    %v1372 = vld [vmem:[%s6 + $0x10] sm:$0xff]
    %v1373 = vld [vmem:[%s6 + $0x18] sm:$0xff]
    %v1374 = vsel %vm51, %v1339, 0
    %v1376 = vsel %vm51, %v1341, 0
    %v1378 = vsel %vm51, %v1343, 0
    %v1380 = vsel %vm51, %v1345, 0
    %v1382 = vsel %vm51, %v1347, 0
    %v1384 = vsel %vm51, %v1349, 0
    %v1386 = vsel %vm51, %v1351, 0
    %v1388 = vsel %vm51, %v1353, 0
    %1390 = vmatprep.subr.mxu0 0.0
    %1391 = vmatpush1.msra.mxu0 0.0
    %1392 = vmatprep.subr.mxu0 0.0
    %1393 = vmatpush1.msra.mxu0 0.0
    %1394 = vmatprep.subr.mxu0 0.0
    %1395 = vmatpush1.msra.mxu0 0.0
    %1396 = vmatprep.subr.mxu0 0.0
    %1397 = vmatpush1.msra.mxu0 0.0
    %1398 = vmatprep.subr.mxu0 0.0
    %1399 = vmatpush1.msra.mxu0 0.0
    %1400 = vmatprep.subr.mxu0 0.0
    %1401 = vmatpush1.msra.mxu0 0.0
    %1402 = vmatprep.subr.mxu0 0.0
    %1403 = vmatpush1.msra.mxu0 0.0
    %1404 = vmatprep.subr.mxu0 0.0
    %1405 = vmatpush1.msra.mxu0 0.0
    %1406 = vmatprep.subr.mxu0 0.0
    %1407 = vmatpush1.msra.mxu0 0.0
    %1408 = vmatprep.subr.mxu0 0.0
    %1409 = vmatpush1.msra.mxu0 0.0
    %1410 = vmatprep.subr.mxu0 0.0
    %1411 = vmatpush1.msra.mxu0 0.0
    %1412 = vmatprep.subr.mxu0 0.0
    %1413 = vmatpush1.msra.mxu0 0.0
    %1414 = vmatprep.subr.mxu0 0.0
    %1415 = vmatpush1.msra.mxu0 %v1373
    %1416 = vmatprep.subr.mxu0 0.0
    %1417 = vmatpush1.msra.mxu0 %v1372
    %1418 = vmatprep.subr.mxu0 0.0
    %1419 = vmatpush1.msra.mxu0 %v1371
    %1420 = vmatprep.subr.mxu0 0.0
    %1421 = vmatpush1.msra.mxu0 %v1370
    %1422 = vmatprep.subr.mxu0 0.0
    %1423 = vmatpush2.msra.mxu0 0.0
    %1424 = vmatprep.subr.mxu0 0.0
    %1425 = vmatpush2.msra.mxu0 0.0
    %1426 = vmatprep.subr.mxu0 0.0
    %1427 = vmatpush2.msra.mxu0 0.0
    %1428 = vmatprep.subr.mxu0 0.0
    %1429 = vmatpush2.msra.mxu0 0.0
    %1430 = vmatprep.subr.mxu0 0.0
    %1431 = vmatpush2.msra.mxu0 0.0
    %1432 = vmatprep.subr.mxu0 0.0
    %1433 = vmatpush2.msra.mxu0 0.0
    %1434 = vmatprep.subr.mxu0 0.0
    %1435 = vmatpush2.msra.mxu0 0.0
    %1436 = vmatprep.subr.mxu0 0.0
    %1437 = vmatpush2.msra.mxu0 0.0
    %1438 = vmatprep.subr.mxu0 0.0
    %1439 = vmatpush2.msra.mxu0 0.0
    %1440 = vmatprep.subr.mxu0 0.0
    %1441 = vmatpush2.msra.mxu0 0.0
    %1442 = vmatprep.subr.mxu0 0.0
    %1443 = vmatpush2.msra.mxu0 0.0
    %1444 = vmatprep.subr.mxu0 0.0
    %1445 = vmatpush2.msra.mxu0 0.0
    %1446 = vmatprep.subr.mxu0 0.0
    %1447 = vmatpush2.msra.mxu0 0.0
    %1448 = vmatprep.subr.mxu0 0.0
    %1449 = vmatpush2.msra.mxu0 0.0
    %1450 = vmatprep.subr.mxu0 0.0
    %1451 = vmatpush2.msra.mxu0 0.0
    %1452 = vmatprep.subr.mxu0 0.0
    %1453 = vmatpush2.msra.mxu0 0.0
    %1454 = vmatprep.mubr.f32.mxu0 0.0
    %1455 = vmatmul.mubr.f32.gmra.mxu0 %v1374
    %v1456 = vpop.f32.mrf.mxu0
    %v1457 = vadd.f32 0.0, %v1456
    %v1458 = vpop.f32.mrf.mxu0
    %1459 = vmatprep.mubr.f32.mxu0 0.0
    %1460 = vmatmul.mubr.f32.gmra.mxu0 %v1376
    %v1461 = vpop.f32.mrf.mxu0
    %v1462 = vadd.f32 0.0, %v1461
    %v1463 = vpop.f32.mrf.mxu0
    %1464 = vmatprep.mubr.f32.mxu0 0.0
    %1465 = vmatmul.mubr.f32.gmra.mxu0 %v1378
    %v1466 = vpop.f32.mrf.mxu0
    %v1467 = vadd.f32 0.0, %v1466
    %v1468 = vpop.f32.mrf.mxu0
    %1469 = vmatprep.mubr.f32.mxu0 0.0
    %1470 = vmatmul.mubr.f32.gmra.mxu0 %v1380
    %v1471 = vpop.f32.mrf.mxu0
    %v1472 = vadd.f32 0.0, %v1471
    %v1473 = vpop.f32.mrf.mxu0
    %1474 = vmatprep.mubr.f32.mxu0 0.0
    %1475 = vmatmul.mubr.f32.gmra.mxu0 %v1382
    %v1476 = vpop.f32.mrf.mxu0
    %v1477 = vadd.f32 0.0, %v1476
    %v1478 = vpop.f32.mrf.mxu0
    %1479 = vmatprep.mubr.f32.mxu0 0.0
    %1480 = vmatmul.mubr.f32.gmra.mxu0 %v1384
    %v1481 = vpop.f32.mrf.mxu0
    %v1482 = vadd.f32 0.0, %v1481
    %v1483 = vpop.f32.mrf.mxu0
    %1484 = vmatprep.mubr.f32.mxu0 0.0
    %1485 = vmatmul.mubr.f32.gmra.mxu0 %v1386
    %v1486 = vpop.f32.mrf.mxu0
    %v1487 = vadd.f32 0.0, %v1486
    %v1488 = vpop.f32.mrf.mxu0
    %1489 = vmatprep.mubr.f32.mxu0 0.0
    %1490 = vmatmul.mubr.f32.gmra.mxu0 %v1388
    %v1491 = vpop.f32.mrf.mxu0
    %v1492 = vadd.f32 0.0, %v1491
    %v1493 = vpop.f32.mrf.mxu0
    %1494 = vdwg.mxu0
    %1495 = vst.msk [vmem:[%s8] sm:$0xff] %vm51, %v1457
    %1496 = vst.msk [vmem:[%s8 + $0x8] sm:$0xff] %vm51, %v1462
    %1497 = vst.msk [vmem:[%s8 + $0x10] sm:$0xff] %vm51, %v1467
    %1498 = vst.msk [vmem:[%s8 + $0x18] sm:$0xff] %vm51, %v1472
    %1499 = vst.msk [vmem:[%s8 + $0x20] sm:$0xff] %vm51, %v1477
    %1500 = vst.msk [vmem:[%s8 + $0x28] sm:$0xff] %vm51, %v1482
    %1501 = vst.msk [vmem:[%s8 + $0x30] sm:$0xff] %vm51, %v1487
    %1502 = vst.msk [vmem:[%s8 + $0x38] sm:$0xff] %vm51, %v1492
    %1504 = vrot.lane.b32.xlu0 %v1324, 32
    %v1505 = vpop.permute.xlu0 %1504
    %1507 = vst.msk [vmem:[#allocation2] sm:$0xff] %vm51, %v1505
    %1509 = vrot.lane.b32.xlu0 %v1329, 96
    %v1510 = vpop.permute.xlu0 %1509
    %1512 = vst.msk [vmem:[#allocation4] sm:$0xff] %vm51, %v1510
    // Predicated region
    $region30: #{tpu_custom_call.1} parent=1 // pred_check
      _
    $region31: #{tpu_custom_call.1} parent=1 // pred_check_branch
      %1514 = sbr.rel (0) target = $region33
    $region32: #{tpu_custom_call.1} parent=1 // pred_region
      _
    $region33: #{tpu_custom_call.1} parent=1 // pred_fallthru
      _
    // Predicated region
    $region34: #{tpu_custom_call.1} parent=1 // pred_check
      _
    $region35: #{tpu_custom_call.1} parent=1 // pred_check_branch
      %1516 = sbr.rel (0) target = $region37
    $region36: #{tpu_custom_call.1} parent=1 // pred_region
      _
    $region37: #{tpu_custom_call.1} parent=1 // pred_fallthru
      _
    // Predicated region
    $region38: #{tpu_custom_call.1} parent=1 // pred_check
      _
    $region39: #{tpu_custom_call.1} parent=1 // pred_check_branch
      %1518 = sbr.rel (0) target = $region41
    $region40: #{tpu_custom_call.1} parent=1 // pred_region
      %s1520 = ssub.s32 128, 128
      %1521 = vsyncadd [#allocation3], %s1520
      %s1523 = sshll.u32 [#allocation2], 4
      %s1524 = int_to_ptr.vmem [resolvable:$true] %s1523
      %1526 = dma.vmem_to_hbm [thread:$0]  %s1524, 128, %s9, [#allocation3]
    $region41: #{tpu_custom_call.1} parent=1 // pred_fallthru
      _
    // Predicated region
    $region42: #{tpu_custom_call.1} parent=1 // pred_check
      _
    $region43: #{tpu_custom_call.1} parent=1 // pred_check_branch
      %1528 = sbr.rel (0) target = $region45
    $region44: #{tpu_custom_call.1} parent=1 // pred_region
      %s1530 = ssub.s32 128, 128
      %1531 = vsyncadd [#allocation5], %s1530
      %s1533 = sshll.u32 [#allocation4], 4
      %s1534 = int_to_ptr.vmem [resolvable:$true] %s1533
      %1536 = dma.vmem_to_hbm [thread:$0]  %s1534, 128, %s10, [#allocation5]
    $region45: #{tpu_custom_call.1} parent=1 // pred_fallthru
      _
    // Predicated region
    $region46: #{tpu_custom_call.1} parent=1 // pred_check
      _
    $region47: #{tpu_custom_call.1} parent=1 // pred_check_branch
      %1538 = sbr.rel (0) target = $region49
    $region48: #{tpu_custom_call.1} parent=1 // pred_region
      _
    $region49: #{tpu_custom_call.1} parent=1 // pred_fallthru
      _
    // Predicated region
    $region50: #{tpu_custom_call.1} parent=1 // pred_check
      _
    $region51: #{tpu_custom_call.1} parent=1 // pred_check_branch
      %1540 = sbr.rel (0) target = $region53
    $region52: #{tpu_custom_call.1} parent=1 // pred_region
      _
    $region53: #{tpu_custom_call.1} parent=1 // pred_fallthru
      _
    // Predicated region
    $region54: #{tpu_custom_call.1} parent=1 // pred_check
      _
    $region55: #{tpu_custom_call.1} parent=1 // pred_check_branch
      %1542 = sbr.rel (0) target = $region57
    $region56: #{tpu_custom_call.1} parent=1 // pred_region
      %1543 = dma.done [#allocation3], 128
    $region57: #{tpu_custom_call.1} parent=1 // pred_fallthru
      _
    // Predicated region
    $region58: #{tpu_custom_call.1} parent=1 // pred_check
      _
    $region59: #{tpu_custom_call.1} parent=1 // pred_check_branch
      %1545 = sbr.rel (0) target = $region61
    $region60: #{tpu_custom_call.1} parent=1 // pred_region
      %1546 = dma.done [#allocation5], 128
    $region61: #{tpu_custom_call.1} parent=1 // pred_fallthru
      _
    %1547 = vsyncpa [#allocation3], 1
    %1548 = vsyncpa [#allocation5], 1

</llo_original>
